<compile_context>
chip_gen: v7x
topology: tpu7x:2x2x1
jax: 0.10.0
libtpu: 0.0.40
codegen_flags: <defaults>
</compile_context>

<pallas_src>
import functools

import jax
import jax.numpy as jnp
from jax.experimental import pallas as pl
from jax.experimental.pallas import tpu as pltpu


def _spatial_attention_kernel(x_ref, cols_ref, w7_ref, b7_ref, o_ref,
                              mean_ref, max_ref, *, c, h, w, k):
    pad = k // 2
    hw = h * w
    off = pad * w + pad          # start of the image interior in the flat padded buffers
    kk = k * k

    # ---- per-pixel channel mean / max: one vectorized reduce over the (C, H*W) block ----
    x32 = x_ref[0].astype(jnp.float32)                            # (C, HW)
    ch_mean = jnp.sum(x32, axis=0, keepdims=True) * (1.0 / c)     # (1, HW)
    ch_max = jnp.max(x32, axis=0, keepdims=True)                  # (1, HW)

    # ---- flat zero-padded stats buffers (rows padded by `pad`; columns handled by masks).
    #      Only the tiny borders are rewritten, never the whole buffer; done every step so
    #      it is correct when the parallel batch axis is split across TensorCores. ----
    zero_border = jnp.zeros((1, off), jnp.float32)
    mean_ref[:, :off] = zero_border
    mean_ref[:, off + hw:] = zero_border
    max_ref[:, :off] = zero_border
    max_ref[:, off + hw:] = zero_border
    mean_ref[:, off:off + hw] = ch_mean
    max_ref[:, off:off + hw] = ch_max

    # ---- Conv2d(2, 1, k, padding=k//2) as 2*k*k shifted flat windows.
    #      Tap (dy, dx) of output pixel p reads flat index p + dy*W + dx of the padded
    #      buffer; vertically out-of-image taps land in the zero borders, horizontally
    #      out-of-image taps are masked once per dx.  PyTorch OIHW weight flattened as
    #      index = cin*k*k + dy*k + dx (cin 0 = mean map, cin 1 = max map). ----
    cols = cols_ref[...]                                          # (1, HW) int32 x-coordinate
    acc = jnp.zeros((1, hw), jnp.float32) + b7_ref[0]
    for dx in range(k):
        part_m = jnp.zeros((1, hw), jnp.float32)
        part_x = jnp.zeros((1, hw), jnp.float32)
        for dy in range(k):
            s = dy * w + dx
            part_m = part_m + w7_ref[dy * k + dx] * mean_ref[:, s:s + hw]
            part_x = part_x + w7_ref[kk + dy * k + dx] * max_ref[:, s:s + hw]
        part = part_m + part_x
        lo = pad - dx                 # valid columns: lo <= col <= hi
        hi = w - 1 + pad - dx
        valid = None
        if lo > 0:
            valid = cols >= lo
        if hi < w - 1:
            vhi = cols <= hi
            valid = vhi if valid is None else valid & vhi
        if valid is not None:
            part = jnp.where(valid, part, 0.0)
        acc = acc + part

    sa = pl.reciprocal(1.0 + jnp.exp(-acc))                       # sigmoid, (1, HW)

    # ---- apply: lane-dense broadcast multiply + unmasked store (x read once, out written once) ----
    o_ref[0] = (x_ref[0].astype(jnp.float32) * sa).astype(o_ref.dtype)


def _round_up(n, m):
    return (n + m - 1) // m * m


def spatial_attention(x, w7, b7, *, kernel_size=7):
    """x: (B, C, H, W); w7: (1, 2, k, k) PyTorch OIHW weight; b7: (1,). Output dtype == x.dtype."""
    B, C, H, W = x.shape
    k = kernel_size
    pad = k // 2
    HW = H * W
    L = HW + 2 * (pad * W + pad)          # flat stats buffer length (pad rows + pad elems each side)

    out_dtype = x.dtype
    x_flat = x.reshape(B, C, HW)                                  # free bitcast, lane-dense layout
    w7_flat = w7.reshape(-1).astype(jnp.float32)                  # (2*k*k,)
    b7_flat = b7.reshape(-1).astype(jnp.float32)                  # (1,)
    # Per-pixel x-coordinate, used in-kernel to mask horizontally out-of-image conv taps.
    cols = (jnp.arange(HW, dtype=jnp.int32) % jnp.int32(W)).reshape(1, HW)

    # ---- VMEM budget from the real block footprint, capped per generation ----
    itemsize = jnp.dtype(x.dtype).itemsize
    xblk = _round_up(C, 8) * _round_up(HW, 128) * itemsize        # one buffered x / out block
    cols_blk = 8 * _round_up(HW, 128) * 4
    scratch = 2 * 8 * _round_up(L, 128) * 4
    need = 2 * (2 * xblk + cols_blk) + scratch + (2 << 20)
    try:
        cap = getattr(pltpu.get_tpu_info(), "vmem_capacity_bytes", 128 << 20)
    except Exception:
        cap = 64 << 20                                            # safe floor (v7x physical)
    budget = (cap * 3) // 4                                       # headroom for compiler scratch
    # TODO(synk): if need > budget (huge C*H*W, mainly v7x), H-tile the grid with a pad-row halo.
    vmem_bytes = int(min(max(need, 16 << 20), budget))

    kernel = functools.partial(_spatial_attention_kernel, c=C, h=H, w=W, k=k)
    out_flat = pl.pallas_call(
        kernel,
        out_shape=jax.ShapeDtypeStruct((B, C, HW), out_dtype),
        grid=(B,),
        in_specs=[
            pl.BlockSpec((1, C, HW), lambda b: (b, 0, 0)),        # x, lane-dense
            pl.BlockSpec((1, HW), lambda b: (0, 0)),              # column indices (fetched once)
            pl.BlockSpec(memory_space=pltpu.MemorySpace.SMEM),    # conv weight scalars
            pl.BlockSpec(memory_space=pltpu.MemorySpace.SMEM),    # conv bias
        ],
        out_specs=pl.BlockSpec((1, C, HW), lambda b: (b, 0, 0)),
        scratch_shapes=[
            pltpu.VMEM((1, L), jnp.float32),                      # padded flat channel-mean map
            pltpu.VMEM((1, L), jnp.float32),                      # padded flat channel-max map
        ],
        compiler_params=pltpu.CompilerParams(
            dimension_semantics=("parallel",),
            vmem_limit_bytes=vmem_bytes,
        ),
    )(x_flat, cols, w7_flat, b7_flat)
    return out_flat.reshape(B, C, H, W)


def spatial_attention_ref(x, w7, b7):
    """Pure-JAX reference mirroring the PyTorch module."""
    xf = x.astype(jnp.float32)
    avg = jnp.mean(xf, axis=1, keepdims=True)
    mx = jnp.max(xf, axis=1, keepdims=True)
    s = jnp.concatenate([avg, mx], axis=1)                        # (B, 2, H, W)
    pad = w7.shape[-1] // 2
    logit = jax.lax.conv_general_dilated(
        s, w7.astype(jnp.float32), window_strides=(1, 1),
        padding=((pad, pad), (pad, pad)),
        dimension_numbers=("NCHW", "OIHW", "NCHW")) + b7.reshape(1, 1, 1, 1)
    return (xf * jax.nn.sigmoid(logit)).astype(x.dtype)


if __name__ == "__main__":
    key = jax.random.PRNGKey(0)
    kx, kw, kb = jax.random.split(key, 3)

    # Main small test (matches the module's expected layout).
    B, C, H, W = 2, 16, 16, 16
    x = jax.random.normal(kx, (B, C, H, W), dtype=jnp.float32)
    w7 = 0.1 * jax.random.normal(kw, (1, 2, 7, 7), dtype=jnp.float32)
    b7 = 0.1 * jax.random.normal(kb, (1,), dtype=jnp.float32)

    out = jax.block_until_ready(jax.jit(spatial_attention)(x, w7, b7))
    assert out.shape == (B, C, H, W)
    assert bool(jnp.all(jnp.isfinite(out)))
    ref = spatial_attention_ref(x, w7, b7)
    err = float(jnp.max(jnp.abs(out - ref)))
    assert err < 1e-4, "max abs err = %g" % err

    # Ragged spatial size (H*W not a multiple of 128) to exercise the column masks / padding.
    x2 = jax.random.normal(kx, (1, 8, 12, 20), dtype=jnp.float32)
    out2 = jax.block_until_ready(jax.jit(spatial_attention)(x2, w7, b7))
    ref2 = spatial_attention_ref(x2, w7, b7)
    err2 = float(jnp.max(jnp.abs(out2 - ref2)))
    assert err2 < 1e-4, "max abs err (ragged) = %g" % err2

    print("KERNEL_OK")
</pallas_src>

<mosaic_0001>
module attributes {stable_mosaic.version = 11 : i64} {
  func.func @_spatial_attention_kernel(%arg0: i32, %arg1: memref<1x16x256xf32, #tpu.memory_space<vmem>>, %arg2: memref<1x256xi32, #tpu.memory_space<vmem>>, %arg3: memref<98xf32, #tpu.memory_space<smem>>, %arg4: memref<1xf32, #tpu.memory_space<smem>>, %arg5: memref<1x16x256xf32, #tpu.memory_space<vmem>>, %arg6: memref<1x358xf32, #tpu.memory_space<vmem>>, %arg7: memref<1x358xf32, #tpu.memory_space<vmem>>) attributes {dimension_semantics = [#tpu.dimension_semantics<parallel>], iteration_bounds = array<i64: 2>, scalar_prefetch = 0 : i64, scratch_operands = 2 : i64, tpu.core_type = #tpu.core_type<tc>, window_params = [{transform_indices = @transform_0, window_bounds = array<i64: 1, 16, 256>}, {pipeline_mode = #tpu.pipeline_mode<synchronous>, transform_indices = @transform_1, window_bounds = array<i64: 1, 256>}, {transform_indices = @transform_2, window_bounds = array<i64: 98>}, {transform_indices = @transform_3, window_bounds = array<i64: 1>}, {transform_indices = @transform_4, window_bounds = array<i64: 1, 16, 256>}]} {
    %c0 = arith.constant 0 : index
    %c0_0 = arith.constant 0 : index
    %c0_1 = arith.constant 0 : index
    %0 = vector.load %arg1[%c0, %c0_0, %c0_1] : memref<1x16x256xf32, #tpu.memory_space<vmem>>, vector<1x16x256xf32>
    %1 = vector.shape_cast %0 : vector<1x16x256xf32> to vector<16x256xf32>
    %cst = arith.constant dense<0.000000e+00> : vector<256xf32>
    %2 = vector.multi_reduction <add>, %1, %cst [0] : vector<16x256xf32> to vector<256xf32>
    %3 = vector.shape_cast %2 : vector<256xf32> to vector<1x256xf32>
    %cst_2 = arith.constant 6.250000e-02 : f32
    %4 = vector.broadcast %cst_2 : f32 to vector<1x256xf32>
    %5 = arith.mulf %3, %4 : vector<1x256xf32>
    %cst_3 = arith.constant dense<0xFF800000> : vector<256xf32>
    %6 = vector.multi_reduction <maximumf>, %1, %cst_3 [0] : vector<16x256xf32> to vector<256xf32>
    %7 = vector.shape_cast %6 : vector<256xf32> to vector<1x256xf32>
    %cst_4 = arith.constant 0.000000e+00 : f32
    %8 = vector.broadcast %cst_4 : f32 to vector<1x51xf32>
    %c0_5 = arith.constant 0 : index
    %c0_6 = arith.constant 0 : index
    %9 = vector.load %arg6[%c0_5, %c0_6] : memref<1x358xf32, #tpu.memory_space<vmem>>, vector<1x51xf32>
    tpu.vector_store %arg6[%c0_5, %c0_6], %8 {strides = array<i32>} : memref<1x358xf32, #tpu.memory_space<vmem>>, vector<1x51xf32>,
    %c0_7 = arith.constant 0 : index
    %c307 = arith.constant 307 : index
    %10 = vector.load %arg6[%c0_7, %c307] : memref<1x358xf32, #tpu.memory_space<vmem>>, vector<1x51xf32>
    tpu.vector_store %arg6[%c0_7, %c307], %8 {strides = array<i32>} : memref<1x358xf32, #tpu.memory_space<vmem>>, vector<1x51xf32>,
    %c0_8 = arith.constant 0 : index
    %c0_9 = arith.constant 0 : index
    %11 = vector.load %arg7[%c0_8, %c0_9] : memref<1x358xf32, #tpu.memory_space<vmem>>, vector<1x51xf32>
    tpu.vector_store %arg7[%c0_8, %c0_9], %8 {strides = array<i32>} : memref<1x358xf32, #tpu.memory_space<vmem>>, vector<1x51xf32>,
    %c0_10 = arith.constant 0 : index
    %c307_11 = arith.constant 307 : index
    %12 = vector.load %arg7[%c0_10, %c307_11] : memref<1x358xf32, #tpu.memory_space<vmem>>, vector<1x51xf32>
    tpu.vector_store %arg7[%c0_10, %c307_11], %8 {strides = array<i32>} : memref<1x358xf32, #tpu.memory_space<vmem>>, vector<1x51xf32>,
    %c0_12 = arith.constant 0 : index
    %c51 = arith.constant 51 : index
    %13 = vector.load %arg6[%c0_12, %c51] : memref<1x358xf32, #tpu.memory_space<vmem>>, vector<1x256xf32>
    tpu.vector_store %arg6[%c0_12, %c51], %5 {strides = array<i32>} : memref<1x358xf32, #tpu.memory_space<vmem>>, vector<1x256xf32>,
    %c0_13 = arith.constant 0 : index
    %c51_14 = arith.constant 51 : index
    %14 = vector.load %arg7[%c0_13, %c51_14] : memref<1x358xf32, #tpu.memory_space<vmem>>, vector<1x256xf32>
    tpu.vector_store %arg7[%c0_13, %c51_14], %7 {strides = array<i32>} : memref<1x358xf32, #tpu.memory_space<vmem>>, vector<1x256xf32>,
    %c0_15 = arith.constant 0 : index
    %c0_16 = arith.constant 0 : index
    %15 = vector.load %arg2[%c0_15, %c0_16] : memref<1x256xi32, #tpu.memory_space<vmem>>, vector<1x256xi32>
    %cst_17 = arith.constant 0.000000e+00 : f32
    %16 = vector.broadcast %cst_17 : f32 to vector<1x256xf32>
    %c0_18 = arith.constant 0 : index
    %17 = memref.load %arg4[%c0_18] : memref<1xf32, #tpu.memory_space<smem>>
    %18 = vector.broadcast %17 : f32 to vector<1x256xf32>
    %19 = arith.addf %16, %18 : vector<1x256xf32>
    %cst_19 = arith.constant 0.000000e+00 : f32
    %20 = vector.broadcast %cst_19 : f32 to vector<1x256xf32>
    %cst_20 = arith.constant 0.000000e+00 : f32
    %21 = vector.broadcast %cst_20 : f32 to vector<1x256xf32>
    %c0_21 = arith.constant 0 : index
    %22 = memref.load %arg3[%c0_21] : memref<98xf32, #tpu.memory_space<smem>>
    %c0_22 = arith.constant 0 : index
    %c0_23 = arith.constant 0 : index
    %23 = vector.load %arg6[%c0_22, %c0_23] : memref<1x358xf32, #tpu.memory_space<vmem>>, vector<1x256xf32>
    %24 = vector.broadcast %22 : f32 to vector<1x256xf32>
    %25 = arith.mulf %24, %23 : vector<1x256xf32>
    %26 = arith.addf %20, %25 : vector<1x256xf32>
    %c49 = arith.constant 49 : index
    %27 = memref.load %arg3[%c49] : memref<98xf32, #tpu.memory_space<smem>>
    %c0_24 = arith.constant 0 : index
    %c0_25 = arith.constant 0 : index
    %28 = vector.load %arg7[%c0_24, %c0_25] : memref<1x358xf32, #tpu.memory_space<vmem>>, vector<1x256xf32>
    %29 = vector.broadcast %27 : f32 to vector<1x256xf32>
    %30 = arith.mulf %29, %28 : vector<1x256xf32>
    %31 = arith.addf %21, %30 : vector<1x256xf32>
    %c7 = arith.constant 7 : index
    %32 = memref.load %arg3[%c7] : memref<98xf32, #tpu.memory_space<smem>>
    %c0_26 = arith.constant 0 : index
    %c16 = arith.constant 16 : index
    %33 = vector.load %arg6[%c0_26, %c16] : memref<1x358xf32, #tpu.memory_space<vmem>>, vector<1x256xf32>
    %34 = vector.broadcast %32 : f32 to vector<1x256xf32>
    %35 = arith.mulf %34, %33 : vector<1x256xf32>
    %36 = arith.addf %26, %35 : vector<1x256xf32>
    %c56 = arith.constant 56 : index
    %37 = memref.load %arg3[%c56] : memref<98xf32, #tpu.memory_space<smem>>
    %c0_27 = arith.constant 0 : index
    %c16_28 = arith.constant 16 : index
    %38 = vector.load %arg7[%c0_27, %c16_28] : memref<1x358xf32, #tpu.memory_space<vmem>>, vector<1x256xf32>
    %39 = vector.broadcast %37 : f32 to vector<1x256xf32>
    %40 = arith.mulf %39, %38 : vector<1x256xf32>
    %41 = arith.addf %31, %40 : vector<1x256xf32>
    %c14 = arith.constant 14 : index
    %42 = memref.load %arg3[%c14] : memref<98xf32, #tpu.memory_space<smem>>
    %c0_29 = arith.constant 0 : index
    %c32 = arith.constant 32 : index
    %43 = vector.load %arg6[%c0_29, %c32] : memref<1x358xf32, #tpu.memory_space<vmem>>, vector<1x256xf32>
    %44 = vector.broadcast %42 : f32 to vector<1x256xf32>
    %45 = arith.mulf %44, %43 : vector<1x256xf32>
    %46 = arith.addf %36, %45 : vector<1x256xf32>
    %c63 = arith.constant 63 : index
    %47 = memref.load %arg3[%c63] : memref<98xf32, #tpu.memory_space<smem>>
    %c0_30 = arith.constant 0 : index
    %c32_31 = arith.constant 32 : index
    %48 = vector.load %arg7[%c0_30, %c32_31] : memref<1x358xf32, #tpu.memory_space<vmem>>, vector<1x256xf32>
    %49 = vector.broadcast %47 : f32 to vector<1x256xf32>
    %50 = arith.mulf %49, %48 : vector<1x256xf32>
    %51 = arith.addf %41, %50 : vector<1x256xf32>
    %c21 = arith.constant 21 : index
    %52 = memref.load %arg3[%c21] : memref<98xf32, #tpu.memory_space<smem>>
    %c0_32 = arith.constant 0 : index
    %c48 = arith.constant 48 : index
    %53 = vector.load %arg6[%c0_32, %c48] : memref<1x358xf32, #tpu.memory_space<vmem>>, vector<1x256xf32>
    %54 = vector.broadcast %52 : f32 to vector<1x256xf32>
    %55 = arith.mulf %54, %53 : vector<1x256xf32>
    %56 = arith.addf %46, %55 : vector<1x256xf32>
    %c70 = arith.constant 70 : index
    %57 = memref.load %arg3[%c70] : memref<98xf32, #tpu.memory_space<smem>>
    %c0_33 = arith.constant 0 : index
    %c48_34 = arith.constant 48 : index
    %58 = vector.load %arg7[%c0_33, %c48_34] : memref<1x358xf32, #tpu.memory_space<vmem>>, vector<1x256xf32>
    %59 = vector.broadcast %57 : f32 to vector<1x256xf32>
    %60 = arith.mulf %59, %58 : vector<1x256xf32>
    %61 = arith.addf %51, %60 : vector<1x256xf32>
    %c28 = arith.constant 28 : index
    %62 = memref.load %arg3[%c28] : memref<98xf32, #tpu.memory_space<smem>>
    %c0_35 = arith.constant 0 : index
    %c64 = arith.constant 64 : index
    %63 = vector.load %arg6[%c0_35, %c64] : memref<1x358xf32, #tpu.memory_space<vmem>>, vector<1x256xf32>
    %64 = vector.broadcast %62 : f32 to vector<1x256xf32>
    %65 = arith.mulf %64, %63 : vector<1x256xf32>
    %66 = arith.addf %56, %65 : vector<1x256xf32>
    %c77 = arith.constant 77 : index
    %67 = memref.load %arg3[%c77] : memref<98xf32, #tpu.memory_space<smem>>
    %c0_36 = arith.constant 0 : index
    %c64_37 = arith.constant 64 : index
    %68 = vector.load %arg7[%c0_36, %c64_37] : memref<1x358xf32, #tpu.memory_space<vmem>>, vector<1x256xf32>
    %69 = vector.broadcast %67 : f32 to vector<1x256xf32>
    %70 = arith.mulf %69, %68 : vector<1x256xf32>
    %71 = arith.addf %61, %70 : vector<1x256xf32>
    %c35 = arith.constant 35 : index
    %72 = memref.load %arg3[%c35] : memref<98xf32, #tpu.memory_space<smem>>
    %c0_38 = arith.constant 0 : index
    %c80 = arith.constant 80 : index
    %73 = vector.load %arg6[%c0_38, %c80] : memref<1x358xf32, #tpu.memory_space<vmem>>, vector<1x256xf32>
    %74 = vector.broadcast %72 : f32 to vector<1x256xf32>
    %75 = arith.mulf %74, %73 : vector<1x256xf32>
    %76 = arith.addf %66, %75 : vector<1x256xf32>
    %c84 = arith.constant 84 : index
    %77 = memref.load %arg3[%c84] : memref<98xf32, #tpu.memory_space<smem>>
    %c0_39 = arith.constant 0 : index
    %c80_40 = arith.constant 80 : index
    %78 = vector.load %arg7[%c0_39, %c80_40] : memref<1x358xf32, #tpu.memory_space<vmem>>, vector<1x256xf32>
    %79 = vector.broadcast %77 : f32 to vector<1x256xf32>
    %80 = arith.mulf %79, %78 : vector<1x256xf32>
    %81 = arith.addf %71, %80 : vector<1x256xf32>
    %c42 = arith.constant 42 : index
    %82 = memref.load %arg3[%c42] : memref<98xf32, #tpu.memory_space<smem>>
    %c0_41 = arith.constant 0 : index
    %c96 = arith.constant 96 : index
    %83 = vector.load %arg6[%c0_41, %c96] : memref<1x358xf32, #tpu.memory_space<vmem>>, vector<1x256xf32>
    %84 = vector.broadcast %82 : f32 to vector<1x256xf32>
    %85 = arith.mulf %84, %83 : vector<1x256xf32>
    %86 = arith.addf %76, %85 : vector<1x256xf32>
    %c91 = arith.constant 91 : index
    %87 = memref.load %arg3[%c91] : memref<98xf32, #tpu.memory_space<smem>>
    %c0_42 = arith.constant 0 : index
    %c96_43 = arith.constant 96 : index
    %88 = vector.load %arg7[%c0_42, %c96_43] : memref<1x358xf32, #tpu.memory_space<vmem>>, vector<1x256xf32>
    %89 = vector.broadcast %87 : f32 to vector<1x256xf32>
    %90 = arith.mulf %89, %88 : vector<1x256xf32>
    %91 = arith.addf %81, %90 : vector<1x256xf32>
    %92 = arith.addf %86, %91 : vector<1x256xf32>
    %c3_i32 = arith.constant 3 : i32
    %93 = vector.broadcast %c3_i32 : i32 to vector<1x256xi32>
    %94 = arith.cmpi sge, %15, %93 : vector<1x256xi32>
    %cst_44 = arith.constant 0.000000e+00 : f32
    %95 = vector.broadcast %cst_44 : f32 to vector<1x256xf32>
    %96 = arith.select %94, %92, %95 : vector<1x256xi1>, vector<1x256xf32>
    %97 = arith.addf %19, %96 : vector<1x256xf32>
    %cst_45 = arith.constant 0.000000e+00 : f32
    %98 = vector.broadcast %cst_45 : f32 to vector<1x256xf32>
    %cst_46 = arith.constant 0.000000e+00 : f32
    %99 = vector.broadcast %cst_46 : f32 to vector<1x256xf32>
    %c1 = arith.constant 1 : index
    %100 = memref.load %arg3[%c1] : memref<98xf32, #tpu.memory_space<smem>>
    %c0_47 = arith.constant 0 : index
    %c1_48 = arith.constant 1 : index
    %101 = vector.load %arg6[%c0_47, %c1_48] : memref<1x358xf32, #tpu.memory_space<vmem>>, vector<1x256xf32>
    %102 = vector.broadcast %100 : f32 to vector<1x256xf32>
    %103 = arith.mulf %102, %101 : vector<1x256xf32>
    %104 = arith.addf %98, %103 : vector<1x256xf32>
    %c50 = arith.constant 50 : index
    %105 = memref.load %arg3[%c50] : memref<98xf32, #tpu.memory_space<smem>>
    %c0_49 = arith.constant 0 : index
    %c1_50 = arith.constant 1 : index
    %106 = vector.load %arg7[%c0_49, %c1_50] : memref<1x358xf32, #tpu.memory_space<vmem>>, vector<1x256xf32>
    %107 = vector.broadcast %105 : f32 to vector<1x256xf32>
    %108 = arith.mulf %107, %106 : vector<1x256xf32>
    %109 = arith.addf %99, %108 : vector<1x256xf32>
    %c8 = arith.constant 8 : index
    %110 = memref.load %arg3[%c8] : memref<98xf32, #tpu.memory_space<smem>>
    %c0_51 = arith.constant 0 : index
    %c17 = arith.constant 17 : index
    %111 = vector.load %arg6[%c0_51, %c17] : memref<1x358xf32, #tpu.memory_space<vmem>>, vector<1x256xf32>
    %112 = vector.broadcast %110 : f32 to vector<1x256xf32>
    %113 = arith.mulf %112, %111 : vector<1x256xf32>
    %114 = arith.addf %104, %113 : vector<1x256xf32>
    %c57 = arith.constant 57 : index
    %115 = memref.load %arg3[%c57] : memref<98xf32, #tpu.memory_space<smem>>
    %c0_52 = arith.constant 0 : index
    %c17_53 = arith.constant 17 : index
    %116 = vector.load %arg7[%c0_52, %c17_53] : memref<1x358xf32, #tpu.memory_space<vmem>>, vector<1x256xf32>
    %117 = vector.broadcast %115 : f32 to vector<1x256xf32>
    %118 = arith.mulf %117, %116 : vector<1x256xf32>
    %119 = arith.addf %109, %118 : vector<1x256xf32>
    %c15 = arith.constant 15 : index
    %120 = memref.load %arg3[%c15] : memref<98xf32, #tpu.memory_space<smem>>
    %c0_54 = arith.constant 0 : index
    %c33 = arith.constant 33 : index
    %121 = vector.load %arg6[%c0_54, %c33] : memref<1x358xf32, #tpu.memory_space<vmem>>, vector<1x256xf32>
    %122 = vector.broadcast %120 : f32 to vector<1x256xf32>
    %123 = arith.mulf %122, %121 : vector<1x256xf32>
    %124 = arith.addf %114, %123 : vector<1x256xf32>
    %c64_55 = arith.constant 64 : index
    %125 = memref.load %arg3[%c64_55] : memref<98xf32, #tpu.memory_space<smem>>
    %c0_56 = arith.constant 0 : index
    %c33_57 = arith.constant 33 : index
    %126 = vector.load %arg7[%c0_56, %c33_57] : memref<1x358xf32, #tpu.memory_space<vmem>>, vector<1x256xf32>
    %127 = vector.broadcast %125 : f32 to vector<1x256xf32>
    %128 = arith.mulf %127, %126 : vector<1x256xf32>
    %129 = arith.addf %119, %128 : vector<1x256xf32>
    %c22 = arith.constant 22 : index
    %130 = memref.load %arg3[%c22] : memref<98xf32, #tpu.memory_space<smem>>
    %c0_58 = arith.constant 0 : index
    %c49_59 = arith.constant 49 : index
    %131 = vector.load %arg6[%c0_58, %c49_59] : memref<1x358xf32, #tpu.memory_space<vmem>>, vector<1x256xf32>
    %132 = vector.broadcast %130 : f32 to vector<1x256xf32>
    %133 = arith.mulf %132, %131 : vector<1x256xf32>
    %134 = arith.addf %124, %133 : vector<1x256xf32>
    %c71 = arith.constant 71 : index
    %135 = memref.load %arg3[%c71] : memref<98xf32, #tpu.memory_space<smem>>
    %c0_60 = arith.constant 0 : index
    %c49_61 = arith.constant 49 : index
    %136 = vector.load %arg7[%c0_60, %c49_61] : memref<1x358xf32, #tpu.memory_space<vmem>>, vector<1x256xf32>
    %137 = vector.broadcast %135 : f32 to vector<1x256xf32>
    %138 = arith.mulf %137, %136 : vector<1x256xf32>
    %139 = arith.addf %129, %138 : vector<1x256xf32>
    %c29 = arith.constant 29 : index
    %140 = memref.load %arg3[%c29] : memref<98xf32, #tpu.memory_space<smem>>
    %c0_62 = arith.constant 0 : index
    %c65 = arith.constant 65 : index
    %141 = vector.load %arg6[%c0_62, %c65] : memref<1x358xf32, #tpu.memory_space<vmem>>, vector<1x256xf32>
    %142 = vector.broadcast %140 : f32 to vector<1x256xf32>
    %143 = arith.mulf %142, %141 : vector<1x256xf32>
    %144 = arith.addf %134, %143 : vector<1x256xf32>
    %c78 = arith.constant 78 : index
    %145 = memref.load %arg3[%c78] : memref<98xf32, #tpu.memory_space<smem>>
    %c0_63 = arith.constant 0 : index
    %c65_64 = arith.constant 65 : index
    %146 = vector.load %arg7[%c0_63, %c65_64] : memref<1x358xf32, #tpu.memory_space<vmem>>, vector<1x256xf32>
    %147 = vector.broadcast %145 : f32 to vector<1x256xf32>
    %148 = arith.mulf %147, %146 : vector<1x256xf32>
    %149 = arith.addf %139, %148 : vector<1x256xf32>
    %c36 = arith.constant 36 : index
    %150 = memref.load %arg3[%c36] : memref<98xf32, #tpu.memory_space<smem>>
    %c0_65 = arith.constant 0 : index
    %c81 = arith.constant 81 : index
    %151 = vector.load %arg6[%c0_65, %c81] : memref<1x358xf32, #tpu.memory_space<vmem>>, vector<1x256xf32>
    %152 = vector.broadcast %150 : f32 to vector<1x256xf32>
    %153 = arith.mulf %152, %151 : vector<1x256xf32>
    %154 = arith.addf %144, %153 : vector<1x256xf32>
    %c85 = arith.constant 85 : index
    %155 = memref.load %arg3[%c85] : memref<98xf32, #tpu.memory_space<smem>>
    %c0_66 = arith.constant 0 : index
    %c81_67 = arith.constant 81 : index
    %156 = vector.load %arg7[%c0_66, %c81_67] : memref<1x358xf32, #tpu.memory_space<vmem>>, vector<1x256xf32>
    %157 = vector.broadcast %155 : f32 to vector<1x256xf32>
    %158 = arith.mulf %157, %156 : vector<1x256xf32>
    %159 = arith.addf %149, %158 : vector<1x256xf32>
    %c43 = arith.constant 43 : index
    %160 = memref.load %arg3[%c43] : memref<98xf32, #tpu.memory_space<smem>>
    %c0_68 = arith.constant 0 : index
    %c97 = arith.constant 97 : index
    %161 = vector.load %arg6[%c0_68, %c97] : memref<1x358xf32, #tpu.memory_space<vmem>>, vector<1x256xf32>
    %162 = vector.broadcast %160 : f32 to vector<1x256xf32>
    %163 = arith.mulf %162, %161 : vector<1x256xf32>
    %164 = arith.addf %154, %163 : vector<1x256xf32>
    %c92 = arith.constant 92 : index
    %165 = memref.load %arg3[%c92] : memref<98xf32, #tpu.memory_space<smem>>
    %c0_69 = arith.constant 0 : index
    %c97_70 = arith.constant 97 : index
    %166 = vector.load %arg7[%c0_69, %c97_70] : memref<1x358xf32, #tpu.memory_space<vmem>>, vector<1x256xf32>
    %167 = vector.broadcast %165 : f32 to vector<1x256xf32>
    %168 = arith.mulf %167, %166 : vector<1x256xf32>
    %169 = arith.addf %159, %168 : vector<1x256xf32>
    %170 = arith.addf %164, %169 : vector<1x256xf32>
    %c2_i32 = arith.constant 2 : i32
    %171 = vector.broadcast %c2_i32 : i32 to vector<1x256xi32>
    %172 = arith.cmpi sge, %15, %171 : vector<1x256xi32>
    %cst_71 = arith.constant 0.000000e+00 : f32
    %173 = vector.broadcast %cst_71 : f32 to vector<1x256xf32>
    %174 = arith.select %172, %170, %173 : vector<1x256xi1>, vector<1x256xf32>
    %175 = arith.addf %97, %174 : vector<1x256xf32>
    %cst_72 = arith.constant 0.000000e+00 : f32
    %176 = vector.broadcast %cst_72 : f32 to vector<1x256xf32>
    %cst_73 = arith.constant 0.000000e+00 : f32
    %177 = vector.broadcast %cst_73 : f32 to vector<1x256xf32>
    %c2 = arith.constant 2 : index
    %178 = memref.load %arg3[%c2] : memref<98xf32, #tpu.memory_space<smem>>
    %c0_74 = arith.constant 0 : index
    %c2_75 = arith.constant 2 : index
    %179 = vector.load %arg6[%c0_74, %c2_75] : memref<1x358xf32, #tpu.memory_space<vmem>>, vector<1x256xf32>
    %180 = vector.broadcast %178 : f32 to vector<1x256xf32>
    %181 = arith.mulf %180, %179 : vector<1x256xf32>
    %182 = arith.addf %176, %181 : vector<1x256xf32>
    %c51_76 = arith.constant 51 : index
    %183 = memref.load %arg3[%c51_76] : memref<98xf32, #tpu.memory_space<smem>>
    %c0_77 = arith.constant 0 : index
    %c2_78 = arith.constant 2 : index
    %184 = vector.load %arg7[%c0_77, %c2_78] : memref<1x358xf32, #tpu.memory_space<vmem>>, vector<1x256xf32>
    %185 = vector.broadcast %183 : f32 to vector<1x256xf32>
    %186 = arith.mulf %185, %184 : vector<1x256xf32>
    %187 = arith.addf %177, %186 : vector<1x256xf32>
    %c9 = arith.constant 9 : index
    %188 = memref.load %arg3[%c9] : memref<98xf32, #tpu.memory_space<smem>>
    %c0_79 = arith.constant 0 : index
    %c18 = arith.constant 18 : index
    %189 = vector.load %arg6[%c0_79, %c18] : memref<1x358xf32, #tpu.memory_space<vmem>>, vector<1x256xf32>
    %190 = vector.broadcast %188 : f32 to vector<1x256xf32>
    %191 = arith.mulf %190, %189 : vector<1x256xf32>
    %192 = arith.addf %182, %191 : vector<1x256xf32>
    %c58 = arith.constant 58 : index
    %193 = memref.load %arg3[%c58] : memref<98xf32, #tpu.memory_space<smem>>
    %c0_80 = arith.constant 0 : index
    %c18_81 = arith.constant 18 : index
    %194 = vector.load %arg7[%c0_80, %c18_81] : memref<1x358xf32, #tpu.memory_space<vmem>>, vector<1x256xf32>
    %195 = vector.broadcast %193 : f32 to vector<1x256xf32>
    %196 = arith.mulf %195, %194 : vector<1x256xf32>
    %197 = arith.addf %187, %196 : vector<1x256xf32>
    %c16_82 = arith.constant 16 : index
    %198 = memref.load %arg3[%c16_82] : memref<98xf32, #tpu.memory_space<smem>>
    %c0_83 = arith.constant 0 : index
    %c34 = arith.constant 34 : index
    %199 = vector.load %arg6[%c0_83, %c34] : memref<1x358xf32, #tpu.memory_space<vmem>>, vector<1x256xf32>
    %200 = vector.broadcast %198 : f32 to vector<1x256xf32>
    %201 = arith.mulf %200, %199 : vector<1x256xf32>
    %202 = arith.addf %192, %201 : vector<1x256xf32>
    %c65_84 = arith.constant 65 : index
    %203 = memref.load %arg3[%c65_84] : memref<98xf32, #tpu.memory_space<smem>>
    %c0_85 = arith.constant 0 : index
    %c34_86 = arith.constant 34 : index
    %204 = vector.load %arg7[%c0_85, %c34_86] : memref<1x358xf32, #tpu.memory_space<vmem>>, vector<1x256xf32>
    %205 = vector.broadcast %203 : f32 to vector<1x256xf32>
    %206 = arith.mulf %205, %204 : vector<1x256xf32>
    %207 = arith.addf %197, %206 : vector<1x256xf32>
    %c23 = arith.constant 23 : index
    %208 = memref.load %arg3[%c23] : memref<98xf32, #tpu.memory_space<smem>>
    %c0_87 = arith.constant 0 : index
    %c50_88 = arith.constant 50 : index
    %209 = vector.load %arg6[%c0_87, %c50_88] : memref<1x358xf32, #tpu.memory_space<vmem>>, vector<1x256xf32>
    %210 = vector.broadcast %208 : f32 to vector<1x256xf32>
    %211 = arith.mulf %210, %209 : vector<1x256xf32>
    %212 = arith.addf %202, %211 : vector<1x256xf32>
    %c72 = arith.constant 72 : index
    %213 = memref.load %arg3[%c72] : memref<98xf32, #tpu.memory_space<smem>>
    %c0_89 = arith.constant 0 : index
    %c50_90 = arith.constant 50 : index
    %214 = vector.load %arg7[%c0_89, %c50_90] : memref<1x358xf32, #tpu.memory_space<vmem>>, vector<1x256xf32>
    %215 = vector.broadcast %213 : f32 to vector<1x256xf32>
    %216 = arith.mulf %215, %214 : vector<1x256xf32>
    %217 = arith.addf %207, %216 : vector<1x256xf32>
    %c30 = arith.constant 30 : index
    %218 = memref.load %arg3[%c30] : memref<98xf32, #tpu.memory_space<smem>>
    %c0_91 = arith.constant 0 : index
    %c66 = arith.constant 66 : index
    %219 = vector.load %arg6[%c0_91, %c66] : memref<1x358xf32, #tpu.memory_space<vmem>>, vector<1x256xf32>
    %220 = vector.broadcast %218 : f32 to vector<1x256xf32>
    %221 = arith.mulf %220, %219 : vector<1x256xf32>
    %222 = arith.addf %212, %221 : vector<1x256xf32>
    %c79 = arith.constant 79 : index
    %223 = memref.load %arg3[%c79] : memref<98xf32, #tpu.memory_space<smem>>
    %c0_92 = arith.constant 0 : index
    %c66_93 = arith.constant 66 : index
    %224 = vector.load %arg7[%c0_92, %c66_93] : memref<1x358xf32, #tpu.memory_space<vmem>>, vector<1x256xf32>
    %225 = vector.broadcast %223 : f32 to vector<1x256xf32>
    %226 = arith.mulf %225, %224 : vector<1x256xf32>
    %227 = arith.addf %217, %226 : vector<1x256xf32>
    %c37 = arith.constant 37 : index
    %228 = memref.load %arg3[%c37] : memref<98xf32, #tpu.memory_space<smem>>
    %c0_94 = arith.constant 0 : index
    %c82 = arith.constant 82 : index
    %229 = vector.load %arg6[%c0_94, %c82] : memref<1x358xf32, #tpu.memory_space<vmem>>, vector<1x256xf32>
    %230 = vector.broadcast %228 : f32 to vector<1x256xf32>
    %231 = arith.mulf %230, %229 : vector<1x256xf32>
    %232 = arith.addf %222, %231 : vector<1x256xf32>
    %c86 = arith.constant 86 : index
    %233 = memref.load %arg3[%c86] : memref<98xf32, #tpu.memory_space<smem>>
    %c0_95 = arith.constant 0 : index
    %c82_96 = arith.constant 82 : index
    %234 = vector.load %arg7[%c0_95, %c82_96] : memref<1x358xf32, #tpu.memory_space<vmem>>, vector<1x256xf32>
    %235 = vector.broadcast %233 : f32 to vector<1x256xf32>
    %236 = arith.mulf %235, %234 : vector<1x256xf32>
    %237 = arith.addf %227, %236 : vector<1x256xf32>
    %c44 = arith.constant 44 : index
    %238 = memref.load %arg3[%c44] : memref<98xf32, #tpu.memory_space<smem>>
    %c0_97 = arith.constant 0 : index
    %c98 = arith.constant 98 : index
    %239 = vector.load %arg6[%c0_97, %c98] : memref<1x358xf32, #tpu.memory_space<vmem>>, vector<1x256xf32>
    %240 = vector.broadcast %238 : f32 to vector<1x256xf32>
    %241 = arith.mulf %240, %239 : vector<1x256xf32>
    %242 = arith.addf %232, %241 : vector<1x256xf32>
    %c93 = arith.constant 93 : index
    %243 = memref.load %arg3[%c93] : memref<98xf32, #tpu.memory_space<smem>>
    %c0_98 = arith.constant 0 : index
    %c98_99 = arith.constant 98 : index
    %244 = vector.load %arg7[%c0_98, %c98_99] : memref<1x358xf32, #tpu.memory_space<vmem>>, vector<1x256xf32>
    %245 = vector.broadcast %243 : f32 to vector<1x256xf32>
    %246 = arith.mulf %245, %244 : vector<1x256xf32>
    %247 = arith.addf %237, %246 : vector<1x256xf32>
    %248 = arith.addf %242, %247 : vector<1x256xf32>
    %c1_i32 = arith.constant 1 : i32
    %249 = vector.broadcast %c1_i32 : i32 to vector<1x256xi32>
    %250 = arith.cmpi sge, %15, %249 : vector<1x256xi32>
    %cst_100 = arith.constant 0.000000e+00 : f32
    %251 = vector.broadcast %cst_100 : f32 to vector<1x256xf32>
    %252 = arith.select %250, %248, %251 : vector<1x256xi1>, vector<1x256xf32>
    %253 = arith.addf %175, %252 : vector<1x256xf32>
    %cst_101 = arith.constant 0.000000e+00 : f32
    %254 = vector.broadcast %cst_101 : f32 to vector<1x256xf32>
    %cst_102 = arith.constant 0.000000e+00 : f32
    %255 = vector.broadcast %cst_102 : f32 to vector<1x256xf32>
    %c3 = arith.constant 3 : index
    %256 = memref.load %arg3[%c3] : memref<98xf32, #tpu.memory_space<smem>>
    %c0_103 = arith.constant 0 : index
    %c3_104 = arith.constant 3 : index
    %257 = vector.load %arg6[%c0_103, %c3_104] : memref<1x358xf32, #tpu.memory_space<vmem>>, vector<1x256xf32>
    %258 = vector.broadcast %256 : f32 to vector<1x256xf32>
    %259 = arith.mulf %258, %257 : vector<1x256xf32>
    %260 = arith.addf %254, %259 : vector<1x256xf32>
    %c52 = arith.constant 52 : index
    %261 = memref.load %arg3[%c52] : memref<98xf32, #tpu.memory_space<smem>>
    %c0_105 = arith.constant 0 : index
    %c3_106 = arith.constant 3 : index
    %262 = vector.load %arg7[%c0_105, %c3_106] : memref<1x358xf32, #tpu.memory_space<vmem>>, vector<1x256xf32>
    %263 = vector.broadcast %261 : f32 to vector<1x256xf32>
    %264 = arith.mulf %263, %262 : vector<1x256xf32>
    %265 = arith.addf %255, %264 : vector<1x256xf32>
    %c10 = arith.constant 10 : index
    %266 = memref.load %arg3[%c10] : memref<98xf32, #tpu.memory_space<smem>>
    %c0_107 = arith.constant 0 : index
    %c19 = arith.constant 19 : index
    %267 = vector.load %arg6[%c0_107, %c19] : memref<1x358xf32, #tpu.memory_space<vmem>>, vector<1x256xf32>
    %268 = vector.broadcast %266 : f32 to vector<1x256xf32>
    %269 = arith.mulf %268, %267 : vector<1x256xf32>
    %270 = arith.addf %260, %269 : vector<1x256xf32>
    %c59 = arith.constant 59 : index
    %271 = memref.load %arg3[%c59] : memref<98xf32, #tpu.memory_space<smem>>
    %c0_108 = arith.constant 0 : index
    %c19_109 = arith.constant 19 : index
    %272 = vector.load %arg7[%c0_108, %c19_109] : memref<1x358xf32, #tpu.memory_space<vmem>>, vector<1x256xf32>
    %273 = vector.broadcast %271 : f32 to vector<1x256xf32>
    %274 = arith.mulf %273, %272 : vector<1x256xf32>
    %275 = arith.addf %265, %274 : vector<1x256xf32>
    %c17_110 = arith.constant 17 : index
    %276 = memref.load %arg3[%c17_110] : memref<98xf32, #tpu.memory_space<smem>>
    %c0_111 = arith.constant 0 : index
    %c35_112 = arith.constant 35 : index
    %277 = vector.load %arg6[%c0_111, %c35_112] : memref<1x358xf32, #tpu.memory_space<vmem>>, vector<1x256xf32>
    %278 = vector.broadcast %276 : f32 to vector<1x256xf32>
    %279 = arith.mulf %278, %277 : vector<1x256xf32>
    %280 = arith.addf %270, %279 : vector<1x256xf32>
    %c66_113 = arith.constant 66 : index
    %281 = memref.load %arg3[%c66_113] : memref<98xf32, #tpu.memory_space<smem>>
    %c0_114 = arith.constant 0 : index
    %c35_115 = arith.constant 35 : index
    %282 = vector.load %arg7[%c0_114, %c35_115] : memref<1x358xf32, #tpu.memory_space<vmem>>, vector<1x256xf32>
    %283 = vector.broadcast %281 : f32 to vector<1x256xf32>
    %284 = arith.mulf %283, %282 : vector<1x256xf32>
    %285 = arith.addf %275, %284 : vector<1x256xf32>
    %c24 = arith.constant 24 : index
    %286 = memref.load %arg3[%c24] : memref<98xf32, #tpu.memory_space<smem>>
    %c0_116 = arith.constant 0 : index
    %c51_117 = arith.constant 51 : index
    %287 = vector.load %arg6[%c0_116, %c51_117] : memref<1x358xf32, #tpu.memory_space<vmem>>, vector<1x256xf32>
    %288 = vector.broadcast %286 : f32 to vector<1x256xf32>
    %289 = arith.mulf %288, %287 : vector<1x256xf32>
    %290 = arith.addf %280, %289 : vector<1x256xf32>
    %c73 = arith.constant 73 : index
    %291 = memref.load %arg3[%c73] : memref<98xf32, #tpu.memory_space<smem>>
    %c0_118 = arith.constant 0 : index
    %c51_119 = arith.constant 51 : index
    %292 = vector.load %arg7[%c0_118, %c51_119] : memref<1x358xf32, #tpu.memory_space<vmem>>, vector<1x256xf32>
    %293 = vector.broadcast %291 : f32 to vector<1x256xf32>
    %294 = arith.mulf %293, %292 : vector<1x256xf32>
    %295 = arith.addf %285, %294 : vector<1x256xf32>
    %c31 = arith.constant 31 : index
    %296 = memref.load %arg3[%c31] : memref<98xf32, #tpu.memory_space<smem>>
    %c0_120 = arith.constant 0 : index
    %c67 = arith.constant 67 : index
    %297 = vector.load %arg6[%c0_120, %c67] : memref<1x358xf32, #tpu.memory_space<vmem>>, vector<1x256xf32>
    %298 = vector.broadcast %296 : f32 to vector<1x256xf32>
    %299 = arith.mulf %298, %297 : vector<1x256xf32>
    %300 = arith.addf %290, %299 : vector<1x256xf32>
    %c80_121 = arith.constant 80 : index
    %301 = memref.load %arg3[%c80_121] : memref<98xf32, #tpu.memory_space<smem>>
    %c0_122 = arith.constant 0 : index
    %c67_123 = arith.constant 67 : index
    %302 = vector.load %arg7[%c0_122, %c67_123] : memref<1x358xf32, #tpu.memory_space<vmem>>, vector<1x256xf32>
    %303 = vector.broadcast %301 : f32 to vector<1x256xf32>
    %304 = arith.mulf %303, %302 : vector<1x256xf32>
    %305 = arith.addf %295, %304 : vector<1x256xf32>
    %c38 = arith.constant 38 : index
    %306 = memref.load %arg3[%c38] : memref<98xf32, #tpu.memory_space<smem>>
    %c0_124 = arith.constant 0 : index
    %c83 = arith.constant 83 : index
    %307 = vector.load %arg6[%c0_124, %c83] : memref<1x358xf32, #tpu.memory_space<vmem>>, vector<1x256xf32>
    %308 = vector.broadcast %306 : f32 to vector<1x256xf32>
    %309 = arith.mulf %308, %307 : vector<1x256xf32>
    %310 = arith.addf %300, %309 : vector<1x256xf32>
    %c87 = arith.constant 87 : index
    %311 = memref.load %arg3[%c87] : memref<98xf32, #tpu.memory_space<smem>>
    %c0_125 = arith.constant 0 : index
    %c83_126 = arith.constant 83 : index
    %312 = vector.load %arg7[%c0_125, %c83_126] : memref<1x358xf32, #tpu.memory_space<vmem>>, vector<1x256xf32>
    %313 = vector.broadcast %311 : f32 to vector<1x256xf32>
    %314 = arith.mulf %313, %312 : vector<1x256xf32>
    %315 = arith.addf %305, %314 : vector<1x256xf32>
    %c45 = arith.constant 45 : index
    %316 = memref.load %arg3[%c45] : memref<98xf32, #tpu.memory_space<smem>>
    %c0_127 = arith.constant 0 : index
    %c99 = arith.constant 99 : index
    %317 = vector.load %arg6[%c0_127, %c99] : memref<1x358xf32, #tpu.memory_space<vmem>>, vector<1x256xf32>
    %318 = vector.broadcast %316 : f32 to vector<1x256xf32>
    %319 = arith.mulf %318, %317 : vector<1x256xf32>
    %320 = arith.addf %310, %319 : vector<1x256xf32>
    %c94 = arith.constant 94 : index
    %321 = memref.load %arg3[%c94] : memref<98xf32, #tpu.memory_space<smem>>
    %c0_128 = arith.constant 0 : index
    %c99_129 = arith.constant 99 : index
    %322 = vector.load %arg7[%c0_128, %c99_129] : memref<1x358xf32, #tpu.memory_space<vmem>>, vector<1x256xf32>
    %323 = vector.broadcast %321 : f32 to vector<1x256xf32>
    %324 = arith.mulf %323, %322 : vector<1x256xf32>
    %325 = arith.addf %315, %324 : vector<1x256xf32>
    %326 = arith.addf %320, %325 : vector<1x256xf32>
    %327 = arith.addf %253, %326 : vector<1x256xf32>
    %cst_130 = arith.constant 0.000000e+00 : f32
    %328 = vector.broadcast %cst_130 : f32 to vector<1x256xf32>
    %cst_131 = arith.constant 0.000000e+00 : f32
    %329 = vector.broadcast %cst_131 : f32 to vector<1x256xf32>
    %c4 = arith.constant 4 : index
    %330 = memref.load %arg3[%c4] : memref<98xf32, #tpu.memory_space<smem>>
    %c0_132 = arith.constant 0 : index
    %c4_133 = arith.constant 4 : index
    %331 = vector.load %arg6[%c0_132, %c4_133] : memref<1x358xf32, #tpu.memory_space<vmem>>, vector<1x256xf32>
    %332 = vector.broadcast %330 : f32 to vector<1x256xf32>
    %333 = arith.mulf %332, %331 : vector<1x256xf32>
    %334 = arith.addf %328, %333 : vector<1x256xf32>
    %c53 = arith.constant 53 : index
    %335 = memref.load %arg3[%c53] : memref<98xf32, #tpu.memory_space<smem>>
    %c0_134 = arith.constant 0 : index
    %c4_135 = arith.constant 4 : index
    %336 = vector.load %arg7[%c0_134, %c4_135] : memref<1x358xf32, #tpu.memory_space<vmem>>, vector<1x256xf32>
    %337 = vector.broadcast %335 : f32 to vector<1x256xf32>
    %338 = arith.mulf %337, %336 : vector<1x256xf32>
    %339 = arith.addf %329, %338 : vector<1x256xf32>
    %c11 = arith.constant 11 : index
    %340 = memref.load %arg3[%c11] : memref<98xf32, #tpu.memory_space<smem>>
    %c0_136 = arith.constant 0 : index
    %c20 = arith.constant 20 : index
    %341 = vector.load %arg6[%c0_136, %c20] : memref<1x358xf32, #tpu.memory_space<vmem>>, vector<1x256xf32>
    %342 = vector.broadcast %340 : f32 to vector<1x256xf32>
    %343 = arith.mulf %342, %341 : vector<1x256xf32>
    %344 = arith.addf %334, %343 : vector<1x256xf32>
    %c60 = arith.constant 60 : index
    %345 = memref.load %arg3[%c60] : memref<98xf32, #tpu.memory_space<smem>>
    %c0_137 = arith.constant 0 : index
    %c20_138 = arith.constant 20 : index
    %346 = vector.load %arg7[%c0_137, %c20_138] : memref<1x358xf32, #tpu.memory_space<vmem>>, vector<1x256xf32>
    %347 = vector.broadcast %345 : f32 to vector<1x256xf32>
    %348 = arith.mulf %347, %346 : vector<1x256xf32>
    %349 = arith.addf %339, %348 : vector<1x256xf32>
    %c18_139 = arith.constant 18 : index
    %350 = memref.load %arg3[%c18_139] : memref<98xf32, #tpu.memory_space<smem>>
    %c0_140 = arith.constant 0 : index
    %c36_141 = arith.constant 36 : index
    %351 = vector.load %arg6[%c0_140, %c36_141] : memref<1x358xf32, #tpu.memory_space<vmem>>, vector<1x256xf32>
    %352 = vector.broadcast %350 : f32 to vector<1x256xf32>
    %353 = arith.mulf %352, %351 : vector<1x256xf32>
    %354 = arith.addf %344, %353 : vector<1x256xf32>
    %c67_142 = arith.constant 67 : index
    %355 = memref.load %arg3[%c67_142] : memref<98xf32, #tpu.memory_space<smem>>
    %c0_143 = arith.constant 0 : index
    %c36_144 = arith.constant 36 : index
    %356 = vector.load %arg7[%c0_143, %c36_144] : memref<1x358xf32, #tpu.memory_space<vmem>>, vector<1x256xf32>
    %357 = vector.broadcast %355 : f32 to vector<1x256xf32>
    %358 = arith.mulf %357, %356 : vector<1x256xf32>
    %359 = arith.addf %349, %358 : vector<1x256xf32>
    %c25 = arith.constant 25 : index
    %360 = memref.load %arg3[%c25] : memref<98xf32, #tpu.memory_space<smem>>
    %c0_145 = arith.constant 0 : index
    %c52_146 = arith.constant 52 : index
    %361 = vector.load %arg6[%c0_145, %c52_146] : memref<1x358xf32, #tpu.memory_space<vmem>>, vector<1x256xf32>
    %362 = vector.broadcast %360 : f32 to vector<1x256xf32>
    %363 = arith.mulf %362, %361 : vector<1x256xf32>
    %364 = arith.addf %354, %363 : vector<1x256xf32>
    %c74 = arith.constant 74 : index
    %365 = memref.load %arg3[%c74] : memref<98xf32, #tpu.memory_space<smem>>
    %c0_147 = arith.constant 0 : index
    %c52_148 = arith.constant 52 : index
    %366 = vector.load %arg7[%c0_147, %c52_148] : memref<1x358xf32, #tpu.memory_space<vmem>>, vector<1x256xf32>
    %367 = vector.broadcast %365 : f32 to vector<1x256xf32>
    %368 = arith.mulf %367, %366 : vector<1x256xf32>
    %369 = arith.addf %359, %368 : vector<1x256xf32>
    %c32_149 = arith.constant 32 : index
    %370 = memref.load %arg3[%c32_149] : memref<98xf32, #tpu.memory_space<smem>>
    %c0_150 = arith.constant 0 : index
    %c68 = arith.constant 68 : index
    %371 = vector.load %arg6[%c0_150, %c68] : memref<1x358xf32, #tpu.memory_space<vmem>>, vector<1x256xf32>
    %372 = vector.broadcast %370 : f32 to vector<1x256xf32>
    %373 = arith.mulf %372, %371 : vector<1x256xf32>
    %374 = arith.addf %364, %373 : vector<1x256xf32>
    %c81_151 = arith.constant 81 : index
    %375 = memref.load %arg3[%c81_151] : memref<98xf32, #tpu.memory_space<smem>>
    %c0_152 = arith.constant 0 : index
    %c68_153 = arith.constant 68 : index
    %376 = vector.load %arg7[%c0_152, %c68_153] : memref<1x358xf32, #tpu.memory_space<vmem>>, vector<1x256xf32>
    %377 = vector.broadcast %375 : f32 to vector<1x256xf32>
    %378 = arith.mulf %377, %376 : vector<1x256xf32>
    %379 = arith.addf %369, %378 : vector<1x256xf32>
    %c39 = arith.constant 39 : index
    %380 = memref.load %arg3[%c39] : memref<98xf32, #tpu.memory_space<smem>>
    %c0_154 = arith.constant 0 : index
    %c84_155 = arith.constant 84 : index
    %381 = vector.load %arg6[%c0_154, %c84_155] : memref<1x358xf32, #tpu.memory_space<vmem>>, vector<1x256xf32>
    %382 = vector.broadcast %380 : f32 to vector<1x256xf32>
    %383 = arith.mulf %382, %381 : vector<1x256xf32>
    %384 = arith.addf %374, %383 : vector<1x256xf32>
    %c88 = arith.constant 88 : index
    %385 = memref.load %arg3[%c88] : memref<98xf32, #tpu.memory_space<smem>>
    %c0_156 = arith.constant 0 : index
    %c84_157 = arith.constant 84 : index
    %386 = vector.load %arg7[%c0_156, %c84_157] : memref<1x358xf32, #tpu.memory_space<vmem>>, vector<1x256xf32>
    %387 = vector.broadcast %385 : f32 to vector<1x256xf32>
    %388 = arith.mulf %387, %386 : vector<1x256xf32>
    %389 = arith.addf %379, %388 : vector<1x256xf32>
    %c46 = arith.constant 46 : index
    %390 = memref.load %arg3[%c46] : memref<98xf32, #tpu.memory_space<smem>>
    %c0_158 = arith.constant 0 : index
    %c100 = arith.constant 100 : index
    %391 = vector.load %arg6[%c0_158, %c100] : memref<1x358xf32, #tpu.memory_space<vmem>>, vector<1x256xf32>
    %392 = vector.broadcast %390 : f32 to vector<1x256xf32>
    %393 = arith.mulf %392, %391 : vector<1x256xf32>
    %394 = arith.addf %384, %393 : vector<1x256xf32>
    %c95 = arith.constant 95 : index
    %395 = memref.load %arg3[%c95] : memref<98xf32, #tpu.memory_space<smem>>
    %c0_159 = arith.constant 0 : index
    %c100_160 = arith.constant 100 : index
    %396 = vector.load %arg7[%c0_159, %c100_160] : memref<1x358xf32, #tpu.memory_space<vmem>>, vector<1x256xf32>
    %397 = vector.broadcast %395 : f32 to vector<1x256xf32>
    %398 = arith.mulf %397, %396 : vector<1x256xf32>
    %399 = arith.addf %389, %398 : vector<1x256xf32>
    %400 = arith.addf %394, %399 : vector<1x256xf32>
    %c14_i32 = arith.constant 14 : i32
    %401 = vector.broadcast %c14_i32 : i32 to vector<1x256xi32>
    %402 = arith.cmpi sle, %15, %401 : vector<1x256xi32>
    %cst_161 = arith.constant 0.000000e+00 : f32
    %403 = vector.broadcast %cst_161 : f32 to vector<1x256xf32>
    %404 = arith.select %402, %400, %403 : vector<1x256xi1>, vector<1x256xf32>
    %405 = arith.addf %327, %404 : vector<1x256xf32>
    %cst_162 = arith.constant 0.000000e+00 : f32
    %406 = vector.broadcast %cst_162 : f32 to vector<1x256xf32>
    %cst_163 = arith.constant 0.000000e+00 : f32
    %407 = vector.broadcast %cst_163 : f32 to vector<1x256xf32>
    %c5 = arith.constant 5 : index
    %408 = memref.load %arg3[%c5] : memref<98xf32, #tpu.memory_space<smem>>
    %c0_164 = arith.constant 0 : index
    %c5_165 = arith.constant 5 : index
    %409 = vector.load %arg6[%c0_164, %c5_165] : memref<1x358xf32, #tpu.memory_space<vmem>>, vector<1x256xf32>
    %410 = vector.broadcast %408 : f32 to vector<1x256xf32>
    %411 = arith.mulf %410, %409 : vector<1x256xf32>
    %412 = arith.addf %406, %411 : vector<1x256xf32>
    %c54 = arith.constant 54 : index
    %413 = memref.load %arg3[%c54] : memref<98xf32, #tpu.memory_space<smem>>
    %c0_166 = arith.constant 0 : index
    %c5_167 = arith.constant 5 : index
    %414 = vector.load %arg7[%c0_166, %c5_167] : memref<1x358xf32, #tpu.memory_space<vmem>>, vector<1x256xf32>
    %415 = vector.broadcast %413 : f32 to vector<1x256xf32>
    %416 = arith.mulf %415, %414 : vector<1x256xf32>
    %417 = arith.addf %407, %416 : vector<1x256xf32>
    %c12 = arith.constant 12 : index
    %418 = memref.load %arg3[%c12] : memref<98xf32, #tpu.memory_space<smem>>
    %c0_168 = arith.constant 0 : index
    %c21_169 = arith.constant 21 : index
    %419 = vector.load %arg6[%c0_168, %c21_169] : memref<1x358xf32, #tpu.memory_space<vmem>>, vector<1x256xf32>
    %420 = vector.broadcast %418 : f32 to vector<1x256xf32>
    %421 = arith.mulf %420, %419 : vector<1x256xf32>
    %422 = arith.addf %412, %421 : vector<1x256xf32>
    %c61 = arith.constant 61 : index
    %423 = memref.load %arg3[%c61] : memref<98xf32, #tpu.memory_space<smem>>
    %c0_170 = arith.constant 0 : index
    %c21_171 = arith.constant 21 : index
    %424 = vector.load %arg7[%c0_170, %c21_171] : memref<1x358xf32, #tpu.memory_space<vmem>>, vector<1x256xf32>
    %425 = vector.broadcast %423 : f32 to vector<1x256xf32>
    %426 = arith.mulf %425, %424 : vector<1x256xf32>
    %427 = arith.addf %417, %426 : vector<1x256xf32>
    %c19_172 = arith.constant 19 : index
    %428 = memref.load %arg3[%c19_172] : memref<98xf32, #tpu.memory_space<smem>>
    %c0_173 = arith.constant 0 : index
    %c37_174 = arith.constant 37 : index
    %429 = vector.load %arg6[%c0_173, %c37_174] : memref<1x358xf32, #tpu.memory_space<vmem>>, vector<1x256xf32>
    %430 = vector.broadcast %428 : f32 to vector<1x256xf32>
    %431 = arith.mulf %430, %429 : vector<1x256xf32>
    %432 = arith.addf %422, %431 : vector<1x256xf32>
    %c68_175 = arith.constant 68 : index
    %433 = memref.load %arg3[%c68_175] : memref<98xf32, #tpu.memory_space<smem>>
    %c0_176 = arith.constant 0 : index
    %c37_177 = arith.constant 37 : index
    %434 = vector.load %arg7[%c0_176, %c37_177] : memref<1x358xf32, #tpu.memory_space<vmem>>, vector<1x256xf32>
    %435 = vector.broadcast %433 : f32 to vector<1x256xf32>
    %436 = arith.mulf %435, %434 : vector<1x256xf32>
    %437 = arith.addf %427, %436 : vector<1x256xf32>
    %c26 = arith.constant 26 : index
    %438 = memref.load %arg3[%c26] : memref<98xf32, #tpu.memory_space<smem>>
    %c0_178 = arith.constant 0 : index
    %c53_179 = arith.constant 53 : index
    %439 = vector.load %arg6[%c0_178, %c53_179] : memref<1x358xf32, #tpu.memory_space<vmem>>, vector<1x256xf32>
    %440 = vector.broadcast %438 : f32 to vector<1x256xf32>
    %441 = arith.mulf %440, %439 : vector<1x256xf32>
    %442 = arith.addf %432, %441 : vector<1x256xf32>
    %c75 = arith.constant 75 : index
    %443 = memref.load %arg3[%c75] : memref<98xf32, #tpu.memory_space<smem>>
    %c0_180 = arith.constant 0 : index
    %c53_181 = arith.constant 53 : index
    %444 = vector.load %arg7[%c0_180, %c53_181] : memref<1x358xf32, #tpu.memory_space<vmem>>, vector<1x256xf32>
    %445 = vector.broadcast %443 : f32 to vector<1x256xf32>
    %446 = arith.mulf %445, %444 : vector<1x256xf32>
    %447 = arith.addf %437, %446 : vector<1x256xf32>
    %c33_182 = arith.constant 33 : index
    %448 = memref.load %arg3[%c33_182] : memref<98xf32, #tpu.memory_space<smem>>
    %c0_183 = arith.constant 0 : index
    %c69 = arith.constant 69 : index
    %449 = vector.load %arg6[%c0_183, %c69] : memref<1x358xf32, #tpu.memory_space<vmem>>, vector<1x256xf32>
    %450 = vector.broadcast %448 : f32 to vector<1x256xf32>
    %451 = arith.mulf %450, %449 : vector<1x256xf32>
    %452 = arith.addf %442, %451 : vector<1x256xf32>
    %c82_184 = arith.constant 82 : index
    %453 = memref.load %arg3[%c82_184] : memref<98xf32, #tpu.memory_space<smem>>
    %c0_185 = arith.constant 0 : index
    %c69_186 = arith.constant 69 : index
    %454 = vector.load %arg7[%c0_185, %c69_186] : memref<1x358xf32, #tpu.memory_space<vmem>>, vector<1x256xf32>
    %455 = vector.broadcast %453 : f32 to vector<1x256xf32>
    %456 = arith.mulf %455, %454 : vector<1x256xf32>
    %457 = arith.addf %447, %456 : vector<1x256xf32>
    %c40 = arith.constant 40 : index
    %458 = memref.load %arg3[%c40] : memref<98xf32, #tpu.memory_space<smem>>
    %c0_187 = arith.constant 0 : index
    %c85_188 = arith.constant 85 : index
    %459 = vector.load %arg6[%c0_187, %c85_188] : memref<1x358xf32, #tpu.memory_space<vmem>>, vector<1x256xf32>
    %460 = vector.broadcast %458 : f32 to vector<1x256xf32>
    %461 = arith.mulf %460, %459 : vector<1x256xf32>
    %462 = arith.addf %452, %461 : vector<1x256xf32>
    %c89 = arith.constant 89 : index
    %463 = memref.load %arg3[%c89] : memref<98xf32, #tpu.memory_space<smem>>
    %c0_189 = arith.constant 0 : index
    %c85_190 = arith.constant 85 : index
    %464 = vector.load %arg7[%c0_189, %c85_190] : memref<1x358xf32, #tpu.memory_space<vmem>>, vector<1x256xf32>
    %465 = vector.broadcast %463 : f32 to vector<1x256xf32>
    %466 = arith.mulf %465, %464 : vector<1x256xf32>
    %467 = arith.addf %457, %466 : vector<1x256xf32>
    %c47 = arith.constant 47 : index
    %468 = memref.load %arg3[%c47] : memref<98xf32, #tpu.memory_space<smem>>
    %c0_191 = arith.constant 0 : index
    %c101 = arith.constant 101 : index
    %469 = vector.load %arg6[%c0_191, %c101] : memref<1x358xf32, #tpu.memory_space<vmem>>, vector<1x256xf32>
    %470 = vector.broadcast %468 : f32 to vector<1x256xf32>
    %471 = arith.mulf %470, %469 : vector<1x256xf32>
    %472 = arith.addf %462, %471 : vector<1x256xf32>
    %c96_192 = arith.constant 96 : index
    %473 = memref.load %arg3[%c96_192] : memref<98xf32, #tpu.memory_space<smem>>
    %c0_193 = arith.constant 0 : index
    %c101_194 = arith.constant 101 : index
    %474 = vector.load %arg7[%c0_193, %c101_194] : memref<1x358xf32, #tpu.memory_space<vmem>>, vector<1x256xf32>
    %475 = vector.broadcast %473 : f32 to vector<1x256xf32>
    %476 = arith.mulf %475, %474 : vector<1x256xf32>
    %477 = arith.addf %467, %476 : vector<1x256xf32>
    %478 = arith.addf %472, %477 : vector<1x256xf32>
    %c13_i32 = arith.constant 13 : i32
    %479 = vector.broadcast %c13_i32 : i32 to vector<1x256xi32>
    %480 = arith.cmpi sle, %15, %479 : vector<1x256xi32>
    %cst_195 = arith.constant 0.000000e+00 : f32
    %481 = vector.broadcast %cst_195 : f32 to vector<1x256xf32>
    %482 = arith.select %480, %478, %481 : vector<1x256xi1>, vector<1x256xf32>
    %483 = arith.addf %405, %482 : vector<1x256xf32>
    %cst_196 = arith.constant 0.000000e+00 : f32
    %484 = vector.broadcast %cst_196 : f32 to vector<1x256xf32>
    %cst_197 = arith.constant 0.000000e+00 : f32
    %485 = vector.broadcast %cst_197 : f32 to vector<1x256xf32>
    %c6 = arith.constant 6 : index
    %486 = memref.load %arg3[%c6] : memref<98xf32, #tpu.memory_space<smem>>
    %c0_198 = arith.constant 0 : index
    %c6_199 = arith.constant 6 : index
    %487 = vector.load %arg6[%c0_198, %c6_199] : memref<1x358xf32, #tpu.memory_space<vmem>>, vector<1x256xf32>
    %488 = vector.broadcast %486 : f32 to vector<1x256xf32>
    %489 = arith.mulf %488, %487 : vector<1x256xf32>
    %490 = arith.addf %484, %489 : vector<1x256xf32>
    %c55 = arith.constant 55 : index
    %491 = memref.load %arg3[%c55] : memref<98xf32, #tpu.memory_space<smem>>
    %c0_200 = arith.constant 0 : index
    %c6_201 = arith.constant 6 : index
    %492 = vector.load %arg7[%c0_200, %c6_201] : memref<1x358xf32, #tpu.memory_space<vmem>>, vector<1x256xf32>
    %493 = vector.broadcast %491 : f32 to vector<1x256xf32>
    %494 = arith.mulf %493, %492 : vector<1x256xf32>
    %495 = arith.addf %485, %494 : vector<1x256xf32>
    %c13 = arith.constant 13 : index
    %496 = memref.load %arg3[%c13] : memref<98xf32, #tpu.memory_space<smem>>
    %c0_202 = arith.constant 0 : index
    %c22_203 = arith.constant 22 : index
    %497 = vector.load %arg6[%c0_202, %c22_203] : memref<1x358xf32, #tpu.memory_space<vmem>>, vector<1x256xf32>
    %498 = vector.broadcast %496 : f32 to vector<1x256xf32>
    %499 = arith.mulf %498, %497 : vector<1x256xf32>
    %500 = arith.addf %490, %499 : vector<1x256xf32>
    %c62 = arith.constant 62 : index
    %501 = memref.load %arg3[%c62] : memref<98xf32, #tpu.memory_space<smem>>
    %c0_204 = arith.constant 0 : index
    %c22_205 = arith.constant 22 : index
    %502 = vector.load %arg7[%c0_204, %c22_205] : memref<1x358xf32, #tpu.memory_space<vmem>>, vector<1x256xf32>
    %503 = vector.broadcast %501 : f32 to vector<1x256xf32>
    %504 = arith.mulf %503, %502 : vector<1x256xf32>
    %505 = arith.addf %495, %504 : vector<1x256xf32>
    %c20_206 = arith.constant 20 : index
    %506 = memref.load %arg3[%c20_206] : memref<98xf32, #tpu.memory_space<smem>>
    %c0_207 = arith.constant 0 : index
    %c38_208 = arith.constant 38 : index
    %507 = vector.load %arg6[%c0_207, %c38_208] : memref<1x358xf32, #tpu.memory_space<vmem>>, vector<1x256xf32>
    %508 = vector.broadcast %506 : f32 to vector<1x256xf32>
    %509 = arith.mulf %508, %507 : vector<1x256xf32>
    %510 = arith.addf %500, %509 : vector<1x256xf32>
    %c69_209 = arith.constant 69 : index
    %511 = memref.load %arg3[%c69_209] : memref<98xf32, #tpu.memory_space<smem>>
    %c0_210 = arith.constant 0 : index
    %c38_211 = arith.constant 38 : index
    %512 = vector.load %arg7[%c0_210, %c38_211] : memref<1x358xf32, #tpu.memory_space<vmem>>, vector<1x256xf32>
    %513 = vector.broadcast %511 : f32 to vector<1x256xf32>
    %514 = arith.mulf %513, %512 : vector<1x256xf32>
    %515 = arith.addf %505, %514 : vector<1x256xf32>
    %c27 = arith.constant 27 : index
    %516 = memref.load %arg3[%c27] : memref<98xf32, #tpu.memory_space<smem>>
    %c0_212 = arith.constant 0 : index
    %c54_213 = arith.constant 54 : index
    %517 = vector.load %arg6[%c0_212, %c54_213] : memref<1x358xf32, #tpu.memory_space<vmem>>, vector<1x256xf32>
    %518 = vector.broadcast %516 : f32 to vector<1x256xf32>
    %519 = arith.mulf %518, %517 : vector<1x256xf32>
    %520 = arith.addf %510, %519 : vector<1x256xf32>
    %c76 = arith.constant 76 : index
    %521 = memref.load %arg3[%c76] : memref<98xf32, #tpu.memory_space<smem>>
    %c0_214 = arith.constant 0 : index
    %c54_215 = arith.constant 54 : index
    %522 = vector.load %arg7[%c0_214, %c54_215] : memref<1x358xf32, #tpu.memory_space<vmem>>, vector<1x256xf32>
    %523 = vector.broadcast %521 : f32 to vector<1x256xf32>
    %524 = arith.mulf %523, %522 : vector<1x256xf32>
    %525 = arith.addf %515, %524 : vector<1x256xf32>
    %c34_216 = arith.constant 34 : index
    %526 = memref.load %arg3[%c34_216] : memref<98xf32, #tpu.memory_space<smem>>
    %c0_217 = arith.constant 0 : index
    %c70_218 = arith.constant 70 : index
    %527 = vector.load %arg6[%c0_217, %c70_218] : memref<1x358xf32, #tpu.memory_space<vmem>>, vector<1x256xf32>
    %528 = vector.broadcast %526 : f32 to vector<1x256xf32>
    %529 = arith.mulf %528, %527 : vector<1x256xf32>
    %530 = arith.addf %520, %529 : vector<1x256xf32>
    %c83_219 = arith.constant 83 : index
    %531 = memref.load %arg3[%c83_219] : memref<98xf32, #tpu.memory_space<smem>>
    %c0_220 = arith.constant 0 : index
    %c70_221 = arith.constant 70 : index
    %532 = vector.load %arg7[%c0_220, %c70_221] : memref<1x358xf32, #tpu.memory_space<vmem>>, vector<1x256xf32>
    %533 = vector.broadcast %531 : f32 to vector<1x256xf32>
    %534 = arith.mulf %533, %532 : vector<1x256xf32>
    %535 = arith.addf %525, %534 : vector<1x256xf32>
    %c41 = arith.constant 41 : index
    %536 = memref.load %arg3[%c41] : memref<98xf32, #tpu.memory_space<smem>>
    %c0_222 = arith.constant 0 : index
    %c86_223 = arith.constant 86 : index
    %537 = vector.load %arg6[%c0_222, %c86_223] : memref<1x358xf32, #tpu.memory_space<vmem>>, vector<1x256xf32>
    %538 = vector.broadcast %536 : f32 to vector<1x256xf32>
    %539 = arith.mulf %538, %537 : vector<1x256xf32>
    %540 = arith.addf %530, %539 : vector<1x256xf32>
    %c90 = arith.constant 90 : index
    %541 = memref.load %arg3[%c90] : memref<98xf32, #tpu.memory_space<smem>>
    %c0_224 = arith.constant 0 : index
    %c86_225 = arith.constant 86 : index
    %542 = vector.load %arg7[%c0_224, %c86_225] : memref<1x358xf32, #tpu.memory_space<vmem>>, vector<1x256xf32>
    %543 = vector.broadcast %541 : f32 to vector<1x256xf32>
    %544 = arith.mulf %543, %542 : vector<1x256xf32>
    %545 = arith.addf %535, %544 : vector<1x256xf32>
    %c48_226 = arith.constant 48 : index
    %546 = memref.load %arg3[%c48_226] : memref<98xf32, #tpu.memory_space<smem>>
    %c0_227 = arith.constant 0 : index
    %c102 = arith.constant 102 : index
    %547 = vector.load %arg6[%c0_227, %c102] : memref<1x358xf32, #tpu.memory_space<vmem>>, vector<1x256xf32>
    %548 = vector.broadcast %546 : f32 to vector<1x256xf32>
    %549 = arith.mulf %548, %547 : vector<1x256xf32>
    %550 = arith.addf %540, %549 : vector<1x256xf32>
    %c97_228 = arith.constant 97 : index
    %551 = memref.load %arg3[%c97_228] : memref<98xf32, #tpu.memory_space<smem>>
    %c0_229 = arith.constant 0 : index
    %c102_230 = arith.constant 102 : index
    %552 = vector.load %arg7[%c0_229, %c102_230] : memref<1x358xf32, #tpu.memory_space<vmem>>, vector<1x256xf32>
    %553 = vector.broadcast %551 : f32 to vector<1x256xf32>
    %554 = arith.mulf %553, %552 : vector<1x256xf32>
    %555 = arith.addf %545, %554 : vector<1x256xf32>
    %556 = arith.addf %550, %555 : vector<1x256xf32>
    %c12_i32 = arith.constant 12 : i32
    %557 = vector.broadcast %c12_i32 : i32 to vector<1x256xi32>
    %558 = arith.cmpi sle, %15, %557 : vector<1x256xi32>
    %cst_231 = arith.constant 0.000000e+00 : f32
    %559 = vector.broadcast %cst_231 : f32 to vector<1x256xf32>
    %560 = arith.select %558, %556, %559 : vector<1x256xi1>, vector<1x256xf32>
    %561 = arith.addf %483, %560 : vector<1x256xf32>
    %cst_232 = arith.constant 0.000000e+00 : f32
    %562 = vector.broadcast %cst_232 : f32 to vector<1x256xf32>
    %563 = arith.subf %562, %561 : vector<1x256xf32>
    %564 = math.exp %563 : vector<1x256xf32>
    %cst_233 = arith.constant 1.000000e+00 : f32
    %565 = vector.broadcast %cst_233 : f32 to vector<1x256xf32>
    %566 = arith.addf %565, %564 : vector<1x256xf32>
    %567 = tpu.reciprocal %566 : vector<1x256xf32> -> vector<1x256xf32>
    %c0_234 = arith.constant 0 : index
    %c0_235 = arith.constant 0 : index
    %c0_236 = arith.constant 0 : index
    %568 = vector.load %arg1[%c0_234, %c0_235, %c0_236] : memref<1x16x256xf32, #tpu.memory_space<vmem>>, vector<1x16x256xf32>
    %569 = vector.shape_cast %568 : vector<1x16x256xf32> to vector<16x256xf32>
    %570 = vector.broadcast %567 : vector<1x256xf32> to vector<16x256xf32>
    %571 = arith.mulf %569, %570 : vector<16x256xf32>
    %c0_237 = arith.constant 0 : index
    %c0_238 = arith.constant 0 : index
    %c0_239 = arith.constant 0 : index
    %572 = vector.load %arg5[%c0_237, %c0_238, %c0_239] : memref<1x16x256xf32, #tpu.memory_space<vmem>>, vector<1x16x256xf32>
    %573 = vector.shape_cast %572 : vector<1x16x256xf32> to vector<16x256xf32>
    %574 = vector.shape_cast %571 : vector<16x256xf32> to vector<1x16x256xf32>
    tpu.vector_store %arg5[%c0_237, %c0_238, %c0_239], %574 {strides = array<i32>} : memref<1x16x256xf32, #tpu.memory_space<vmem>>, vector<1x16x256xf32>,
    return
  }
  func.func @transform_0(%arg0: i32) -> (i32, i32, i32) {
    %c0_i32 = arith.constant 0 : i32
    %c0_i32_0 = arith.constant 0 : i32
    %c0_i32_1 = arith.constant 0 : i32
    return %arg0, %c0_i32, %c0_i32_0 : i32, i32, i32
  }
  func.func @transform_1(%arg0: i32) -> (i32, i32) {
    %c0_i32 = arith.constant 0 : i32
    %c0_i32_0 = arith.constant 0 : i32
    %c0_i32_1 = arith.constant 0 : i32
    return %c0_i32, %c0_i32_0 : i32, i32
  }
  func.func @transform_2(%arg0: i32) -> i32 {
    %c0_i32 = arith.constant 0 : i32
    %c0_i32_0 = arith.constant 0 : i32
    return %c0_i32 : i32
  }
  func.func @transform_3(%arg0: i32) -> i32 {
    %c0_i32 = arith.constant 0 : i32
    %c0_i32_0 = arith.constant 0 : i32
    return %c0_i32 : i32
  }
  func.func @transform_4(%arg0: i32) -> (i32, i32, i32) {
    %c0_i32 = arith.constant 0 : i32
    %c0_i32_0 = arith.constant 0 : i32
    %c0_i32_1 = arith.constant 0 : i32
    return %arg0, %c0_i32, %c0_i32_0 : i32, i32, i32
  }
}

</mosaic_0001>

<llo_original>
// kernel: spatial_attention.1
$region0: #{spatial_attention.1}
  #allocation0 [shape = 'u32[]', space=smem, size = 0x4, offset = 0x4, fixed_abs, tag = 'smem constant byte address 0x4 - core index']
  #allocation1 [shape = 'u32[144,128]{1,0:T(1,128)}', space=vmem, size = 0x12000, scoped, tag = 'internal scratch']
  #allocation2 [shape = 'f32[1,358]{1,0:T(1,128)}', space=vmem, size = 0x600, scoped, tag = 'scratch operand']
  #allocation3 [shape = 'f32[1,358]{1,0:T(1,128)}', space=vmem, size = 0x600, scoped, tag = 'scratch operand']
  #allocation4 [shape = 'f32[1]{0:T(128)S(6)}', space=smem, size = 0x200, scoped, tag = 'scoped memory for spatial_attention.1']
  %s0 = inlined_call_operand.vmem [shape: f32[2,16,256], index: 0, kind: input, shape index: {}]
  %s1 = inlined_call_operand.vmem [shape: s32[1,256], index: 1, kind: input, shape index: {}]
  %s2 = inlined_call_operand.vmem [shape: f32[98], index: 2, kind: input, shape index: {}]
  %s3 = inlined_call_operand.<no memory space> [shape: f32[1], index: 3, kind: input, shape index: {}]
  %s4 = inlined_call_operand.vmem [shape: f32[2,16,256], index: 4, kind: output, shape index: {}]
  %s5 = sld [smem:[#allocation0]]
  $region53: #{spatial_attention.1} parent=0
    _
  %s7 = ssub.s32 1, %s5
  %s8 = scalar_select 0, %s7, %s5
  %9 = sst [smem:[#allocation4]] %s3
  $region1: #{spatial_attention.1} parent=0
    #allocation5 [shape = 'u8[512]{0}', space=smem, size = 0x200, scoped, tag = 'input window, operand 2, single buffered']
    #allocation6 [shape = 's32[2]{0}', space=sflag, size = 0x8, scoped, tag = 'scoped memory for spatial_attention.1']
    %10 = vsyncpa [#allocation6], 0
    loop: start=0, step=1, limit=4
    $region2: #{spatial_attention.1} parent=1 // loop_pre_header
      _
    $region3: #{spatial_attention.1} parent=1 // loop_header
      %s12 = sphi 0, %s16
      %p13 = scmp.ge.s32.totalorder %s12, 4
      %s22 = sphi 0, %s24
      %s25 = sphi 0, %s22
      %s26 = sphi 0, %s25
      %s42 = sphi 0, %s26
      %s46 = sphi 0, %s46
      %s48 = sphi 0, %s46
      %s49 = sphi 0, %s48
      %s63 = sphi 0, %s49
      %s67 = sphi 0, %s67
      %s69 = sphi 0, %s67
      %s70 = sphi 0, %s69
      %s84 = sphi 0, %s70
      %s88 = sphi 0, %s88
      %s90 = sphi 0, %s88
      %s91 = sphi 0, %s90
      %s105 = sphi 0, %s91
      %s111 = sphi 0, %s113
      %s114 = sphi 0, %s111
      %s115 = sphi 0, %s114
      %s131 = sphi 0, %s115
    $region4: #{spatial_attention.1} parent=1 // loop_header_branch
      %15 = sbr.rel (%p13) target = $region8
    $region5: #{spatial_attention.1} parent=1 // loop_body
      %s17 = ssub.s32 %s12, 1
      %s18 = ssub.s32 %s12, 2
      %s19 = sadd.s32 %s12, 1
      %s20 = ssub.s32 %s12, %s19
      %p21 = scmp.eq.s32.totalorder %s20, 0
      %s23 = sadd.s32 %s22, 1
      %s24 = scalar_select %p21, %s22, %s23
      %p27 = pneg %p21
      %p28 = scmp.eq.s32.totalorder %s12, 1
      %p29 = por %p27, %p28
      %p30 = scmp.ne.s32.totalorder %s22, %s25
      %p31 = scmp.eq.s32.totalorder %s12, 0
      %p32 = por %p30, %p31
      %p33 = scmp.ne.s32.totalorder %s22, %s25
      %p34 = scmp.eq.s32.totalorder %s17, 1
      %p35 = por %p33, %p34
      %p36 = scmp.ne.s32.totalorder %s25, %s26
      %p37 = scmp.eq.s32.totalorder %s17, 0
      %p38 = por %p36, %p37
      %p39 = scmp.ne.s32.totalorder %s25, %s26
      %p40 = scmp.eq.s32.totalorder %s18, 1
      %p41 = por %p39, %p40
      %p43 = scmp.ne.s32.totalorder %s26, %s42
      %p44 = scmp.eq.s32.totalorder %s18, 0
      %p45 = por %p43, %p44
      %s47 = sadd.s32 %s46, 1
      %p50 = scmp.eq.s32.totalorder %s12, 1
      %p51 = scmp.ne.s32.totalorder %s46, %s48
      %p52 = scmp.eq.s32.totalorder %s12, 0
      %p53 = por %p51, %p52
      %p54 = scmp.ne.s32.totalorder %s46, %s48
      %p55 = scmp.eq.s32.totalorder %s17, 1
      %p56 = por %p54, %p55
      %p57 = scmp.ne.s32.totalorder %s48, %s49
      %p58 = scmp.eq.s32.totalorder %s17, 0
      %p59 = por %p57, %p58
      %p60 = scmp.ne.s32.totalorder %s48, %s49
      %p61 = scmp.eq.s32.totalorder %s18, 1
      %p62 = por %p60, %p61
      %p64 = scmp.ne.s32.totalorder %s49, %s63
      %p65 = scmp.eq.s32.totalorder %s18, 0
      %p66 = por %p64, %p65
      %s68 = sadd.s32 %s67, 1
      %p71 = scmp.eq.s32.totalorder %s12, 1
      %p72 = scmp.ne.s32.totalorder %s67, %s69
      %p73 = scmp.eq.s32.totalorder %s12, 0
      %p74 = por %p72, %p73
      %p75 = scmp.ne.s32.totalorder %s67, %s69
      %p76 = scmp.eq.s32.totalorder %s17, 1
      %p77 = por %p75, %p76
      %p78 = scmp.ne.s32.totalorder %s69, %s70
      %p79 = scmp.eq.s32.totalorder %s17, 0
      %p80 = por %p78, %p79
      %p81 = scmp.ne.s32.totalorder %s69, %s70
      %p82 = scmp.eq.s32.totalorder %s18, 1
      %p83 = por %p81, %p82
      %p85 = scmp.ne.s32.totalorder %s70, %s84
      %p86 = scmp.eq.s32.totalorder %s18, 0
      %p87 = por %p85, %p86
      %s89 = sadd.s32 %s88, 1
      %p92 = scmp.eq.s32.totalorder %s12, 1
      %p93 = scmp.ne.s32.totalorder %s88, %s90
      %p94 = scmp.eq.s32.totalorder %s12, 0
      %p95 = por %p93, %p94
      %p96 = scmp.ne.s32.totalorder %s88, %s90
      %p97 = scmp.eq.s32.totalorder %s17, 1
      %p98 = por %p96, %p97
      %p99 = scmp.ne.s32.totalorder %s90, %s91
      %p100 = scmp.eq.s32.totalorder %s17, 0
      %p101 = por %p99, %p100
      %p102 = scmp.ne.s32.totalorder %s90, %s91
      %p103 = scmp.eq.s32.totalorder %s18, 1
      %p104 = por %p102, %p103
      %p106 = scmp.ne.s32.totalorder %s91, %s105
      %p107 = scmp.eq.s32.totalorder %s18, 0
      %p108 = por %p106, %p107
      %s109 = ssub.s32 %s12, %s19
      %p110 = scmp.eq.s32.totalorder %s109, 0
      %s112 = sadd.s32 %s111, 1
      %s113 = scalar_select %p110, %s111, %s112
      %p116 = pneg %p110
      %p117 = scmp.eq.s32.totalorder %s12, 1
      %p118 = por %p116, %p117
      %p119 = scmp.ne.s32.totalorder %s111, %s114
      %p120 = scmp.eq.s32.totalorder %s12, 0
      %p121 = por %p119, %p120
      %p122 = scmp.ne.s32.totalorder %s111, %s114
      %p123 = scmp.eq.s32.totalorder %s17, 1
      %p124 = por %p122, %p123
      %p125 = scmp.ne.s32.totalorder %s114, %s115
      %p126 = scmp.eq.s32.totalorder %s17, 0
      %p127 = por %p125, %p126
      %p128 = scmp.ne.s32.totalorder %s114, %s115
      %p129 = scmp.eq.s32.totalorder %s18, 1
      %p130 = por %p128, %p129
      %p132 = scmp.ne.s32.totalorder %s115, %s131
      %p133 = scmp.eq.s32.totalorder %s18, 0
      %p134 = por %p132, %p133
      %p135 = scmp.le.s32.totalorder 1, %s12
      %p136 = scmp.lt.s32.totalorder %s12, 3
      %p137 = pnand %p135, %p136
      %p138 = pneg %p137
      // Predicated region
      $region9: #{spatial_attention.1} parent=5 // pred_check
        _
      $region10: #{spatial_attention.1} parent=5 // pred_check_branch
        %140 = sbr.rel (%p137) target = $region12
      $region11: #{spatial_attention.1} parent=5 // pred_region
        %s141 = ssub.s32 %s12, 1
        // Predicated region
        $region13: #{spatial_attention.1} parent=11 // pred_check
          %p142 = pneg %p59
        $region14: #{spatial_attention.1} parent=11 // pred_check_branch
          %144 = sbr.rel (%p142) target = $region16
        $region15: #{spatial_attention.1} parent=11 // pred_region
          _
        $region16: #{spatial_attention.1} parent=11 // pred_fallthru
          _
        // Predicated region
        $region17: #{spatial_attention.1} parent=11 // pred_check
          %p145 = pneg %p80
        $region18: #{spatial_attention.1} parent=11 // pred_check_branch
          %147 = sbr.rel (%p145) target = $region20
        $region19: #{spatial_attention.1} parent=11 // pred_region
          %s149 = ssub.s32 16, 16
          %150 = vsyncadd [#allocation6], %s149
          %s152 = sshll.u32 %s2, 4
          %s153 = int_to_ptr.vmem [resolvable:$true] %s152
          %155 = dma.vmem_to_smem %s153, 16, [#allocation5], [#allocation6]
        $region20: #{spatial_attention.1} parent=11 // pred_fallthru
          _
        // Predicated region
        $region21: #{spatial_attention.1} parent=11 // pred_check
          %p156 = pneg %p101
        $region22: #{spatial_attention.1} parent=11 // pred_check_branch
          %158 = sbr.rel (%p156) target = $region24
        $region23: #{spatial_attention.1} parent=11 // pred_region
          _
        $region24: #{spatial_attention.1} parent=11 // pred_fallthru
          _
      $region12: #{spatial_attention.1} parent=5 // pred_fallthru
        _
      %p159 = scmp.lt.s32.totalorder %s12, 2
      // Predicated region
      $region25: #{spatial_attention.1} parent=5 // pred_check
        %p160 = pneg %p159
      $region26: #{spatial_attention.1} parent=5 // pred_check_branch
        %162 = sbr.rel (%p160) target = $region28
      $region27: #{spatial_attention.1} parent=5 // pred_region
        // Predicated region
        $region29: #{spatial_attention.1} parent=27 // pred_check
          %p163 = pneg %p32
        $region30: #{spatial_attention.1} parent=27 // pred_check_branch
          %165 = sbr.rel (%p163) target = $region32
        $region31: #{spatial_attention.1} parent=27 // pred_region
          %p166 = scmp.lt.s32.totalorder %s12, 1
          %s167 = scalar_select %p166, %s12, 1
          %s168 = smul.addr %s167, 4
          %s169 = smul.addr %s168, 8
          %s170 = scalar_lea.vmem %s0, %s169
        $region32: #{spatial_attention.1} parent=27 // pred_fallthru
          _
      $region28: #{spatial_attention.1} parent=5 // pred_fallthru
        _
      %p171 = scmp.le.s32.totalorder 1, %s12
      %p172 = scmp.lt.s32.totalorder %s12, 3
      %p173 = pnand %p171, %p172
      %p174 = pneg %p173
      // Predicated region
      $region33: #{spatial_attention.1} parent=5 // pred_check
        _
      $region34: #{spatial_attention.1} parent=5 // pred_check_branch
        %176 = sbr.rel (%p173) target = $region36
      $region35: #{spatial_attention.1} parent=5 // pred_region
        %s177 = ssub.s32 %s12, 1
        // Predicated region
        $region37: #{spatial_attention.1} parent=35 // pred_check
          %p178 = pneg %p80
        $region38: #{spatial_attention.1} parent=35 // pred_check_branch
          %180 = sbr.rel (%p178) target = $region40
        $region39: #{spatial_attention.1} parent=35 // pred_region
          %181 = dma.done [#allocation6], 16
        $region40: #{spatial_attention.1} parent=35 // pred_fallthru
          _
        %182 = sfence
        %p183 = scmp.lt.s32.totalorder %s17, 1
        %s184 = scalar_select %p183, %s17, 1
        %s185 = smul.addr %s184, 4
        %s186 = smul.addr %s185, 8
        %s187 = scalar_lea.vmem %s0, %s186
        %p188 = pneg %p38
        %p189 = pneg %p35
        %p190 = pneg %p59
        %p191 = pneg %p56
        %p192 = pneg %p80
        %p193 = pneg %p77
        %p194 = pneg %p101
        %p195 = pneg %p98
        %p196 = pneg %p127
        %p197 = pneg %p124
        %p198 = scmp.lt.s32.totalorder %s17, 1
        %s199 = scalar_select %p198, %s17, 1
        %s200 = smul.addr %s199, 4
        %s201 = smul.addr %s200, 8
        %s202 = scalar_lea.vmem %s4, %s201
        %p203 = scmp.lt.s32.totalorder %s17, 1
        %s204 = scalar_select %p203, %s17, 1
        %s205 = smul.addr %s204, 4
        %s206 = smul.addr %s205, 8
        %s207 = scalar_lea.vmem %s0, %s206
        %p208 = scmp.lt.s32.totalorder %s17, 1
        %s209 = scalar_select %p208, %s17, 1
        %s210 = smul.addr %s209, 4
        %s211 = smul.addr %s210, 8
        %s212 = scalar_lea.vmem %s4, %s211
        %v213 = vld [vmem:[%s207] sm:$0xff]
        %v214 = vld [vmem:[%s207 + $0x8] sm:$0xff]
        %v215 = vld [vmem:[%s207 + $0x10] sm:$0xff]
        %v216 = vld [vmem:[%s207 + $0x18] sm:$0xff]
        %v217 = vadd.f32 %v213, %v215
        %v218 = vrot.slane %v217, 4
        %v219 = vadd.f32 %v217, %v218
        %v220 = vrot.slane %v219, 2
        %v221 = vadd.f32 %v219, %v220
        %v222 = vrot.slane %v221, 1
        %v223 = vadd.f32 %v221, %v222
        %v224 = vadd.f32 %v214, %v216
        %v225 = vrot.slane %v224, 4
        %v226 = vadd.f32 %v224, %v225
        %v227 = vrot.slane %v226, 2
        %v228 = vadd.f32 %v226, %v227
        %v229 = vrot.slane %v228, 1
        %v230 = vadd.f32 %v228, %v229
        %v231 = vmul.f32 %v223, 0.0625
        %v232 = vmul.f32 %v230, 0.0625
        %v233 = vmax.f32 %v213, %v215
        %v234 = vrot.slane %v233, 4
        %v235 = vmax.f32 %v233, %v234
        %v236 = vrot.slane %v235, 2
        %v237 = vmax.f32 %v235, %v236
        %v238 = vrot.slane %v237, 1
        %v239 = vmax.f32 %v237, %v238
        %v240 = vmax.f32 %v214, %v216
        %v241 = vrot.slane %v240, 4
        %v242 = vmax.f32 %v240, %v241
        %v243 = vrot.slane %v242, 2
        %v244 = vmax.f32 %v242, %v243
        %v245 = vrot.slane %v244, 1
        %v246 = vmax.f32 %v244, %v245
        %v247 = vlaneseq
        %vm248 = vcmp.ge.s32.totalorder %v247, 0
        %vm249 = vcmp.lt.s32.totalorder %v247, 51
        %vm250 = vmand %vm248, %vm249
        %251 = vst.msk [vmem:[#allocation2] sm:$0x1] %vm250, 0.0
        %vm252 = vcmp.ge.s32.totalorder %v247, 51
        %vm253 = vcmp.lt.s32.totalorder %v247, 102
        %vm254 = vmand %vm252, %vm253
        %255 = vst.msk [vmem:[#allocation2 + $0x2] sm:$0x1] %vm254, 0.0
        %256 = vst.msk [vmem:[#allocation3] sm:$0x1] %vm250, 0.0
        %257 = vst.msk [vmem:[#allocation3 + $0x2] sm:$0x1] %vm254, 0.0
        %v260 = vcombine.low %v231, %v232
        %v262 = vunpack.c.l.s4 1966171168
        %v263 = vunpack.c.0.s8 %v262
        %v264 = vlaneseq
        %v265 = vshrl.u32 %v264, 7
        %v266 = vsub.s32 %v263, %v265
        %v267 = vrot.slane %v260, %v266
        %v269 = vunpack.c.l.s4 1966171168
        %v270 = vunpack.c.0.s8 %v269
        %v271 = vlaneseq
        %v272 = vshrl.u32 %v271, 7
        %v273 = vsub.s32 %v270, %v272
        %v274 = vrot.slane %v267, %v273
        %275 = vrot.lane.b32.xlu0 %v274, 51
        %v276 = vpop.permute.xlu0 %275
        %v277 = vrot.slane %v276, 7
        %vm278 = vcmask 416768
        %v279 = vsel %vm278, %v277, %v276
        %vm281 = vcmp.lt.s32.totalorder %v247, 307
        %vm282 = vmand %vm252, %vm281
        %283 = vst.msk [vmem:[#allocation2] sm:$0x7] %vm282, %v279
        %v286 = vcombine.low %v239, %v246
        %v288 = vunpack.c.l.s4 1966171168
        %v289 = vunpack.c.0.s8 %v288
        %v290 = vlaneseq
        %v291 = vshrl.u32 %v290, 7
        %v292 = vsub.s32 %v289, %v291
        %v293 = vrot.slane %v286, %v292
        %v295 = vunpack.c.l.s4 1966171168
        %v296 = vunpack.c.0.s8 %v295
        %v297 = vlaneseq
        %v298 = vshrl.u32 %v297, 7
        %v299 = vsub.s32 %v296, %v298
        %v300 = vrot.slane %v293, %v299
        %301 = vrot.lane.b32.xlu0 %v300, 51
        %v302 = vpop.permute.xlu0 %301
        %v303 = vrot.slane %v302, 7
        %v304 = vsel %vm278, %v303, %v302
        %306 = vst.msk [vmem:[#allocation3] sm:$0x7] %vm282, %v304
        %v307 = vld [vmem:[%s1] sm:$0x3]
        %s308 = sld [smem:[#allocation4]]
        %v309 = vstv %s308
        %v310 = vadd.f32 %v309, 0.0
        %s311 = sld [smem:[#allocation5]]
        %v312 = vld [vmem:[#allocation2] sm:$0x3]
        %v313 = vstv %s311
        %v314 = vmul.f32 %v313, %v312
        %v315 = vadd.f32 %v314, 0.0
        %s316 = sld [smem:[#allocation5 + $0x31]]
        %v317 = vld [vmem:[#allocation3] sm:$0x3]
        %v318 = vstv %s316
        %v319 = vmul.f32 %v318, %v317
        %v320 = vadd.f32 %v319, 0.0
        %s321 = sld [smem:[#allocation5 + $0x7]]
        %v322 = vld [vmem:[#allocation2] sm:$0x7]
        %v323 = vstv %s321
        %v324 = vmul.f32 %v323, %v322
        %326 = vrot.lane.b32.xlu0 %v324, 112
        %v327 = vpop.permute.xlu0 %326
        %v328 = vrot.slane %v327, 1
        %vm329 = vcmask 916480
        %v330 = vsel %vm329, %v327, %v328
        %v332 = vadd.f32 %v315, %v330
        %s333 = sld [smem:[#allocation5 + $0x38]]
        %v334 = vld [vmem:[#allocation3] sm:$0x7]
        %v335 = vstv %s333
        %v336 = vmul.f32 %v335, %v334
        %338 = vrot.lane.b32.xlu0 %v336, 112
        %v339 = vpop.permute.xlu0 %338
        %v340 = vrot.slane %v339, 1
        %v341 = vsel %vm329, %v339, %v340
        %v343 = vadd.f32 %v320, %v341
        %s344 = sld [smem:[#allocation5 + $0xe]]
        %v345 = vstv %s344
        %v346 = vmul.f32 %v345, %v322
        %348 = vrot.lane.b32.xlu0 %v346, 96
        %v349 = vpop.permute.xlu0 %348
        %v350 = vrot.slane %v349, 1
        %vm351 = vcmask 785408
        %v352 = vsel %vm351, %v349, %v350
        %v354 = vadd.f32 %v332, %v352
        %s355 = sld [smem:[#allocation5 + $0x3f]]
        %v356 = vstv %s355
        %v357 = vmul.f32 %v356, %v334
        %359 = vrot.lane.b32.xlu0 %v357, 96
        %v360 = vpop.permute.xlu0 %359
        %v361 = vrot.slane %v360, 1
        %v362 = vsel %vm351, %v360, %v361
        %v364 = vadd.f32 %v343, %v362
        %s365 = sld [smem:[#allocation5 + $0x15]]
        %v366 = vstv %s365
        %v367 = vmul.f32 %v366, %v322
        %369 = vrot.lane.b32.xlu0 %v367, 80
        %v370 = vpop.permute.xlu0 %369
        %v371 = vrot.slane %v370, 1
        %vm372 = vcmask 654336
        %v373 = vsel %vm372, %v370, %v371
        %v375 = vadd.f32 %v354, %v373
        %s376 = sld [smem:[#allocation5 + $0x46]]
        %v377 = vstv %s376
        %v378 = vmul.f32 %v377, %v334
        %380 = vrot.lane.b32.xlu0 %v378, 80
        %v381 = vpop.permute.xlu0 %380
        %v382 = vrot.slane %v381, 1
        %v383 = vsel %vm372, %v381, %v382
        %v385 = vadd.f32 %v364, %v383
        %s386 = sld [smem:[#allocation5 + $0x1c]]
        %v387 = vstv %s386
        %v388 = vmul.f32 %v387, %v322
        %390 = vrot.lane.b32.xlu0 %v388, 64
        %v391 = vpop.permute.xlu0 %390
        %v392 = vrot.slane %v391, 1
        %vm393 = vcmask 523264
        %v394 = vsel %vm393, %v391, %v392
        %v396 = vadd.f32 %v375, %v394
        %s397 = sld [smem:[#allocation5 + $0x4d]]
        %v398 = vstv %s397
        %v399 = vmul.f32 %v398, %v334
        %401 = vrot.lane.b32.xlu0 %v399, 64
        %v402 = vpop.permute.xlu0 %401
        %v403 = vrot.slane %v402, 1
        %v404 = vsel %vm393, %v402, %v403
        %v406 = vadd.f32 %v385, %v404
        %s407 = sld [smem:[#allocation5 + $0x23]]
        %v408 = vstv %s407
        %v409 = vmul.f32 %v408, %v322
        %411 = vrot.lane.b32.xlu0 %v409, 48
        %v412 = vpop.permute.xlu0 %411
        %v413 = vrot.slane %v412, 1
        %vm414 = vcmask 392192
        %v415 = vsel %vm414, %v412, %v413
        %v417 = vadd.f32 %v396, %v415
        %s418 = sld [smem:[#allocation5 + $0x54]]
        %v419 = vstv %s418
        %v420 = vmul.f32 %v419, %v334
        %422 = vrot.lane.b32.xlu0 %v420, 48
        %v423 = vpop.permute.xlu0 %422
        %v424 = vrot.slane %v423, 1
        %v425 = vsel %vm414, %v423, %v424
        %v427 = vadd.f32 %v406, %v425
        %s428 = sld [smem:[#allocation5 + $0x2a]]
        %v429 = vstv %s428
        %v430 = vmul.f32 %v429, %v322
        %432 = vrot.lane.b32.xlu0 %v430, 32
        %v433 = vpop.permute.xlu0 %432
        %v434 = vrot.slane %v433, 1
        %vm435 = vcmask 261120
        %v436 = vsel %vm435, %v433, %v434
        %v438 = vadd.f32 %v417, %v436
        %s439 = sld [smem:[#allocation5 + $0x5b]]
        %v440 = vstv %s439
        %v441 = vmul.f32 %v440, %v334
        %443 = vrot.lane.b32.xlu0 %v441, 32
        %v444 = vpop.permute.xlu0 %443
        %v445 = vrot.slane %v444, 1
        %v446 = vsel %vm435, %v444, %v445
        %v448 = vadd.f32 %v427, %v446
        %v449 = vadd.f32 %v438, %v448
        %vm450 = vcmp.ge.s32.totalorder %v307, 3
        %v451 = vsel %vm450, %v449, 0.0
        %v452 = vadd.f32 %v310, %v451
        %s453 = sld [smem:[#allocation5 + $0x1]]
        %v454 = vstv %s453
        %v455 = vmul.f32 %v454, %v322
        %v456 = vadd.f32 %v455, 0.0
        %s457 = sld [smem:[#allocation5 + $0x32]]
        %v458 = vstv %s457
        %v459 = vmul.f32 %v458, %v334
        %v460 = vadd.f32 %v459, 0.0
        %s461 = sld [smem:[#allocation5 + $0x8]]
        %v462 = vstv %s461
        %v463 = vmul.f32 %v462, %v322
        %465 = vrot.lane.b32.xlu0 %v463, 112
        %v466 = vpop.permute.xlu0 %465
        %v467 = vrot.slane %v466, 1
        %v468 = vsel %vm329, %v466, %v467
        %v470 = vadd.f32 %v456, %v468
        %s471 = sld [smem:[#allocation5 + $0x39]]
        %v472 = vstv %s471
        %v473 = vmul.f32 %v472, %v334
        %475 = vrot.lane.b32.xlu0 %v473, 112
        %v476 = vpop.permute.xlu0 %475
        %v477 = vrot.slane %v476, 1
        %v478 = vsel %vm329, %v476, %v477
        %v480 = vadd.f32 %v460, %v478
        %s481 = sld [smem:[#allocation5 + $0xf]]
        %v482 = vstv %s481
        %v483 = vmul.f32 %v482, %v322
        %485 = vrot.lane.b32.xlu0 %v483, 96
        %v486 = vpop.permute.xlu0 %485
        %v487 = vrot.slane %v486, 1
        %v488 = vsel %vm351, %v486, %v487
        %v490 = vadd.f32 %v470, %v488
        %s491 = sld [smem:[#allocation5 + $0x40]]
        %v492 = vstv %s491
        %v493 = vmul.f32 %v492, %v334
        %495 = vrot.lane.b32.xlu0 %v493, 96
        %v496 = vpop.permute.xlu0 %495
        %v497 = vrot.slane %v496, 1
        %v498 = vsel %vm351, %v496, %v497
        %v500 = vadd.f32 %v480, %v498
        %s501 = sld [smem:[#allocation5 + $0x16]]
        %v502 = vstv %s501
        %v503 = vmul.f32 %v502, %v322
        %505 = vrot.lane.b32.xlu0 %v503, 80
        %v506 = vpop.permute.xlu0 %505
        %v507 = vrot.slane %v506, 1
        %v508 = vsel %vm372, %v506, %v507
        %v510 = vadd.f32 %v490, %v508
        %s511 = sld [smem:[#allocation5 + $0x47]]
        %v512 = vstv %s511
        %v513 = vmul.f32 %v512, %v334
        %515 = vrot.lane.b32.xlu0 %v513, 80
        %v516 = vpop.permute.xlu0 %515
        %v517 = vrot.slane %v516, 1
        %v518 = vsel %vm372, %v516, %v517
        %v520 = vadd.f32 %v500, %v518
        %s521 = sld [smem:[#allocation5 + $0x1d]]
        %v522 = vstv %s521
        %v523 = vmul.f32 %v522, %v322
        %525 = vrot.lane.b32.xlu0 %v523, 64
        %v526 = vpop.permute.xlu0 %525
        %v527 = vrot.slane %v526, 1
        %v528 = vsel %vm393, %v526, %v527
        %v530 = vadd.f32 %v510, %v528
        %s531 = sld [smem:[#allocation5 + $0x4e]]
        %v532 = vstv %s531
        %v533 = vmul.f32 %v532, %v334
        %535 = vrot.lane.b32.xlu0 %v533, 64
        %v536 = vpop.permute.xlu0 %535
        %v537 = vrot.slane %v536, 1
        %v538 = vsel %vm393, %v536, %v537
        %v540 = vadd.f32 %v520, %v538
        %s541 = sld [smem:[#allocation5 + $0x24]]
        %v542 = vstv %s541
        %v543 = vmul.f32 %v542, %v322
        %545 = vrot.lane.b32.xlu0 %v543, 48
        %v546 = vpop.permute.xlu0 %545
        %v547 = vrot.slane %v546, 1
        %v548 = vsel %vm414, %v546, %v547
        %v550 = vadd.f32 %v530, %v548
        %s551 = sld [smem:[#allocation5 + $0x55]]
        %v552 = vstv %s551
        %v553 = vmul.f32 %v552, %v334
        %555 = vrot.lane.b32.xlu0 %v553, 48
        %v556 = vpop.permute.xlu0 %555
        %v557 = vrot.slane %v556, 1
        %v558 = vsel %vm414, %v556, %v557
        %v560 = vadd.f32 %v540, %v558
        %s561 = sld [smem:[#allocation5 + $0x2b]]
        %v562 = vstv %s561
        %v563 = vmul.f32 %v562, %v322
        %565 = vrot.lane.b32.xlu0 %v563, 32
        %v566 = vpop.permute.xlu0 %565
        %v567 = vrot.slane %v566, 1
        %v568 = vsel %vm435, %v566, %v567
        %v570 = vadd.f32 %v550, %v568
        %s571 = sld [smem:[#allocation5 + $0x5c]]
        %v572 = vstv %s571
        %v573 = vmul.f32 %v572, %v334
        %575 = vrot.lane.b32.xlu0 %v573, 32
        %v576 = vpop.permute.xlu0 %575
        %v577 = vrot.slane %v576, 1
        %v578 = vsel %vm435, %v576, %v577
        %v580 = vadd.f32 %v560, %v578
        %v581 = vadd.f32 %v570, %v580
        %vm582 = vcmp.ge.s32.totalorder %v307, 2
        %584 = vrot.lane.b32.xlu0 %v581, 127
        %v585 = vpop.permute.xlu0 %584
        %v586 = vrot.slane %v585, 1
        %vm587 = vcmask 1039360
        %v588 = vsel %vm587, %v585, %v586
        %v590 = vsel %vm582, %v588, 0.0
        %v591 = vadd.f32 %v452, %v590
        %s592 = sld [smem:[#allocation5 + $0x2]]
        %v593 = vstv %s592
        %v594 = vmul.f32 %v593, %v322
        %v595 = vadd.f32 %v594, 0.0
        %s596 = sld [smem:[#allocation5 + $0x33]]
        %v597 = vstv %s596
        %v598 = vmul.f32 %v597, %v334
        %v599 = vadd.f32 %v598, 0.0
        %s600 = sld [smem:[#allocation5 + $0x9]]
        %v601 = vstv %s600
        %v602 = vmul.f32 %v601, %v322
        %604 = vrot.lane.b32.xlu0 %v602, 112
        %v605 = vpop.permute.xlu0 %604
        %v606 = vrot.slane %v605, 1
        %v607 = vsel %vm329, %v605, %v606
        %v609 = vadd.f32 %v595, %v607
        %s610 = sld [smem:[#allocation5 + $0x3a]]
        %v611 = vstv %s610
        %v612 = vmul.f32 %v611, %v334
        %614 = vrot.lane.b32.xlu0 %v612, 112
        %v615 = vpop.permute.xlu0 %614
        %v616 = vrot.slane %v615, 1
        %v617 = vsel %vm329, %v615, %v616
        %v619 = vadd.f32 %v599, %v617
        %s620 = sld [smem:[#allocation5 + $0x10]]
        %v621 = vstv %s620
        %v622 = vmul.f32 %v621, %v322
        %624 = vrot.lane.b32.xlu0 %v622, 96
        %v625 = vpop.permute.xlu0 %624
        %v626 = vrot.slane %v625, 1
        %v627 = vsel %vm351, %v625, %v626
        %v629 = vadd.f32 %v609, %v627
        %s630 = sld [smem:[#allocation5 + $0x41]]
        %v631 = vstv %s630
        %v632 = vmul.f32 %v631, %v334
        %634 = vrot.lane.b32.xlu0 %v632, 96
        %v635 = vpop.permute.xlu0 %634
        %v636 = vrot.slane %v635, 1
        %v637 = vsel %vm351, %v635, %v636
        %v639 = vadd.f32 %v619, %v637
        %s640 = sld [smem:[#allocation5 + $0x17]]
        %v641 = vstv %s640
        %v642 = vmul.f32 %v641, %v322
        %644 = vrot.lane.b32.xlu0 %v642, 80
        %v645 = vpop.permute.xlu0 %644
        %v646 = vrot.slane %v645, 1
        %v647 = vsel %vm372, %v645, %v646
        %v649 = vadd.f32 %v629, %v647
        %s650 = sld [smem:[#allocation5 + $0x48]]
        %v651 = vstv %s650
        %v652 = vmul.f32 %v651, %v334
        %654 = vrot.lane.b32.xlu0 %v652, 80
        %v655 = vpop.permute.xlu0 %654
        %v656 = vrot.slane %v655, 1
        %v657 = vsel %vm372, %v655, %v656
        %v659 = vadd.f32 %v639, %v657
        %s660 = sld [smem:[#allocation5 + $0x1e]]
        %v661 = vstv %s660
        %v662 = vmul.f32 %v661, %v322
        %664 = vrot.lane.b32.xlu0 %v662, 64
        %v665 = vpop.permute.xlu0 %664
        %v666 = vrot.slane %v665, 1
        %v667 = vsel %vm393, %v665, %v666
        %v669 = vadd.f32 %v649, %v667
        %s670 = sld [smem:[#allocation5 + $0x4f]]
        %v671 = vstv %s670
        %v672 = vmul.f32 %v671, %v334
        %674 = vrot.lane.b32.xlu0 %v672, 64
        %v675 = vpop.permute.xlu0 %674
        %v676 = vrot.slane %v675, 1
        %v677 = vsel %vm393, %v675, %v676
        %v679 = vadd.f32 %v659, %v677
        %s680 = sld [smem:[#allocation5 + $0x25]]
        %v681 = vstv %s680
        %v682 = vmul.f32 %v681, %v322
        %684 = vrot.lane.b32.xlu0 %v682, 48
        %v685 = vpop.permute.xlu0 %684
        %v686 = vrot.slane %v685, 1
        %v687 = vsel %vm414, %v685, %v686
        %v689 = vadd.f32 %v669, %v687
        %s690 = sld [smem:[#allocation5 + $0x56]]
        %v691 = vstv %s690
        %v692 = vmul.f32 %v691, %v334
        %694 = vrot.lane.b32.xlu0 %v692, 48
        %v695 = vpop.permute.xlu0 %694
        %v696 = vrot.slane %v695, 1
        %v697 = vsel %vm414, %v695, %v696
        %v699 = vadd.f32 %v679, %v697
        %s700 = sld [smem:[#allocation5 + $0x2c]]
        %v701 = vstv %s700
        %v702 = vmul.f32 %v701, %v322
        %704 = vrot.lane.b32.xlu0 %v702, 32
        %v705 = vpop.permute.xlu0 %704
        %v706 = vrot.slane %v705, 1
        %v707 = vsel %vm435, %v705, %v706
        %v709 = vadd.f32 %v689, %v707
        %s710 = sld [smem:[#allocation5 + $0x5d]]
        %v711 = vstv %s710
        %v712 = vmul.f32 %v711, %v334
        %714 = vrot.lane.b32.xlu0 %v712, 32
        %v715 = vpop.permute.xlu0 %714
        %v716 = vrot.slane %v715, 1
        %v717 = vsel %vm435, %v715, %v716
        %v719 = vadd.f32 %v699, %v717
        %v720 = vadd.f32 %v709, %v719
        %vm721 = vcmp.ge.s32.totalorder %v307, 1
        %723 = vrot.lane.b32.xlu0 %v720, 126
        %v724 = vpop.permute.xlu0 %723
        %v725 = vrot.slane %v724, 1
        %vm726 = vcmask 1031168
        %v727 = vsel %vm726, %v724, %v725
        %v729 = vsel %vm721, %v727, 0.0
        %v730 = vadd.f32 %v591, %v729
        %s731 = sld [smem:[#allocation5 + $0x3]]
        %v732 = vstv %s731
        %v733 = vmul.f32 %v732, %v322
        %v734 = vadd.f32 %v733, 0.0
        %s735 = sld [smem:[#allocation5 + $0x34]]
        %v736 = vstv %s735
        %v737 = vmul.f32 %v736, %v334
        %v738 = vadd.f32 %v737, 0.0
        %s739 = sld [smem:[#allocation5 + $0xa]]
        %v740 = vstv %s739
        %v741 = vmul.f32 %v740, %v322
        %743 = vrot.lane.b32.xlu0 %v741, 112
        %v744 = vpop.permute.xlu0 %743
        %v745 = vrot.slane %v744, 1
        %v746 = vsel %vm329, %v744, %v745
        %v748 = vadd.f32 %v734, %v746
        %s749 = sld [smem:[#allocation5 + $0x3b]]
        %v750 = vstv %s749
        %v751 = vmul.f32 %v750, %v334
        %753 = vrot.lane.b32.xlu0 %v751, 112
        %v754 = vpop.permute.xlu0 %753
        %v755 = vrot.slane %v754, 1
        %v756 = vsel %vm329, %v754, %v755
        %v758 = vadd.f32 %v738, %v756
        %s759 = sld [smem:[#allocation5 + $0x11]]
        %v760 = vstv %s759
        %v761 = vmul.f32 %v760, %v322
        %763 = vrot.lane.b32.xlu0 %v761, 96
        %v764 = vpop.permute.xlu0 %763
        %v765 = vrot.slane %v764, 1
        %v766 = vsel %vm351, %v764, %v765
        %v768 = vadd.f32 %v748, %v766
        %s769 = sld [smem:[#allocation5 + $0x42]]
        %v770 = vstv %s769
        %v771 = vmul.f32 %v770, %v334
        %773 = vrot.lane.b32.xlu0 %v771, 96
        %v774 = vpop.permute.xlu0 %773
        %v775 = vrot.slane %v774, 1
        %v776 = vsel %vm351, %v774, %v775
        %v778 = vadd.f32 %v758, %v776
        %s779 = sld [smem:[#allocation5 + $0x18]]
        %v780 = vstv %s779
        %v781 = vmul.f32 %v780, %v322
        %783 = vrot.lane.b32.xlu0 %v781, 80
        %v784 = vpop.permute.xlu0 %783
        %v785 = vrot.slane %v784, 1
        %v786 = vsel %vm372, %v784, %v785
        %v788 = vadd.f32 %v768, %v786
        %s789 = sld [smem:[#allocation5 + $0x49]]
        %v790 = vstv %s789
        %v791 = vmul.f32 %v790, %v334
        %793 = vrot.lane.b32.xlu0 %v791, 80
        %v794 = vpop.permute.xlu0 %793
        %v795 = vrot.slane %v794, 1
        %v796 = vsel %vm372, %v794, %v795
        %v798 = vadd.f32 %v778, %v796
        %s799 = sld [smem:[#allocation5 + $0x1f]]
        %v800 = vstv %s799
        %v801 = vmul.f32 %v800, %v322
        %803 = vrot.lane.b32.xlu0 %v801, 64
        %v804 = vpop.permute.xlu0 %803
        %v805 = vrot.slane %v804, 1
        %v806 = vsel %vm393, %v804, %v805
        %v808 = vadd.f32 %v788, %v806
        %s809 = sld [smem:[#allocation5 + $0x50]]
        %v810 = vstv %s809
        %v811 = vmul.f32 %v810, %v334
        %813 = vrot.lane.b32.xlu0 %v811, 64
        %v814 = vpop.permute.xlu0 %813
        %v815 = vrot.slane %v814, 1
        %v816 = vsel %vm393, %v814, %v815
        %v818 = vadd.f32 %v798, %v816
        %s819 = sld [smem:[#allocation5 + $0x26]]
        %v820 = vstv %s819
        %v821 = vmul.f32 %v820, %v322
        %823 = vrot.lane.b32.xlu0 %v821, 48
        %v824 = vpop.permute.xlu0 %823
        %v825 = vrot.slane %v824, 1
        %v826 = vsel %vm414, %v824, %v825
        %v828 = vadd.f32 %v808, %v826
        %s829 = sld [smem:[#allocation5 + $0x57]]
        %v830 = vstv %s829
        %v831 = vmul.f32 %v830, %v334
        %833 = vrot.lane.b32.xlu0 %v831, 48
        %v834 = vpop.permute.xlu0 %833
        %v835 = vrot.slane %v834, 1
        %v836 = vsel %vm414, %v834, %v835
        %v838 = vadd.f32 %v818, %v836
        %s839 = sld [smem:[#allocation5 + $0x2d]]
        %v840 = vstv %s839
        %v841 = vmul.f32 %v840, %v322
        %843 = vrot.lane.b32.xlu0 %v841, 32
        %v844 = vpop.permute.xlu0 %843
        %v845 = vrot.slane %v844, 1
        %v846 = vsel %vm435, %v844, %v845
        %v848 = vadd.f32 %v828, %v846
        %s849 = sld [smem:[#allocation5 + $0x5e]]
        %v850 = vstv %s849
        %v851 = vmul.f32 %v850, %v334
        %853 = vrot.lane.b32.xlu0 %v851, 32
        %v854 = vpop.permute.xlu0 %853
        %v855 = vrot.slane %v854, 1
        %v856 = vsel %vm435, %v854, %v855
        %v858 = vadd.f32 %v838, %v856
        %v859 = vadd.f32 %v848, %v858
        %861 = vrot.lane.b32.xlu0 %v859, 125
        %v862 = vpop.permute.xlu0 %861
        %v863 = vrot.slane %v862, 1
        %vm864 = vcmask 1022976
        %v865 = vsel %vm864, %v862, %v863
        %v867 = vadd.f32 %v730, %v865
        %s868 = sld [smem:[#allocation5 + $0x4]]
        %v869 = vstv %s868
        %v870 = vmul.f32 %v869, %v322
        %v871 = vadd.f32 %v870, 0.0
        %s872 = sld [smem:[#allocation5 + $0x35]]
        %v873 = vstv %s872
        %v874 = vmul.f32 %v873, %v334
        %v875 = vadd.f32 %v874, 0.0
        %s876 = sld [smem:[#allocation5 + $0xb]]
        %v877 = vstv %s876
        %v878 = vmul.f32 %v877, %v322
        %880 = vrot.lane.b32.xlu0 %v878, 112
        %v881 = vpop.permute.xlu0 %880
        %v882 = vrot.slane %v881, 1
        %v883 = vsel %vm329, %v881, %v882
        %v885 = vadd.f32 %v871, %v883
        %s886 = sld [smem:[#allocation5 + $0x3c]]
        %v887 = vstv %s886
        %v888 = vmul.f32 %v887, %v334
        %890 = vrot.lane.b32.xlu0 %v888, 112
        %v891 = vpop.permute.xlu0 %890
        %v892 = vrot.slane %v891, 1
        %v893 = vsel %vm329, %v891, %v892
        %v895 = vadd.f32 %v875, %v893
        %s896 = sld [smem:[#allocation5 + $0x12]]
        %v897 = vstv %s896
        %v898 = vmul.f32 %v897, %v322
        %900 = vrot.lane.b32.xlu0 %v898, 96
        %v901 = vpop.permute.xlu0 %900
        %v902 = vrot.slane %v901, 1
        %v903 = vsel %vm351, %v901, %v902
        %v905 = vadd.f32 %v885, %v903
        %s906 = sld [smem:[#allocation5 + $0x43]]
        %v907 = vstv %s906
        %v908 = vmul.f32 %v907, %v334
        %910 = vrot.lane.b32.xlu0 %v908, 96
        %v911 = vpop.permute.xlu0 %910
        %v912 = vrot.slane %v911, 1
        %v913 = vsel %vm351, %v911, %v912
        %v915 = vadd.f32 %v895, %v913
        %s916 = sld [smem:[#allocation5 + $0x19]]
        %v917 = vstv %s916
        %v918 = vmul.f32 %v917, %v322
        %920 = vrot.lane.b32.xlu0 %v918, 80
        %v921 = vpop.permute.xlu0 %920
        %v922 = vrot.slane %v921, 1
        %v923 = vsel %vm372, %v921, %v922
        %v925 = vadd.f32 %v905, %v923
        %s926 = sld [smem:[#allocation5 + $0x4a]]
        %v927 = vstv %s926
        %v928 = vmul.f32 %v927, %v334
        %930 = vrot.lane.b32.xlu0 %v928, 80
        %v931 = vpop.permute.xlu0 %930
        %v932 = vrot.slane %v931, 1
        %v933 = vsel %vm372, %v931, %v932
        %v935 = vadd.f32 %v915, %v933
        %s936 = sld [smem:[#allocation5 + $0x20]]
        %v937 = vstv %s936
        %v938 = vmul.f32 %v937, %v322
        %940 = vrot.lane.b32.xlu0 %v938, 64
        %v941 = vpop.permute.xlu0 %940
        %v942 = vrot.slane %v941, 1
        %v943 = vsel %vm393, %v941, %v942
        %v945 = vadd.f32 %v925, %v943
        %s946 = sld [smem:[#allocation5 + $0x51]]
        %v947 = vstv %s946
        %v948 = vmul.f32 %v947, %v334
        %950 = vrot.lane.b32.xlu0 %v948, 64
        %v951 = vpop.permute.xlu0 %950
        %v952 = vrot.slane %v951, 1
        %v953 = vsel %vm393, %v951, %v952
        %v955 = vadd.f32 %v935, %v953
        %s956 = sld [smem:[#allocation5 + $0x27]]
        %v957 = vstv %s956
        %v958 = vmul.f32 %v957, %v322
        %960 = vrot.lane.b32.xlu0 %v958, 48
        %v961 = vpop.permute.xlu0 %960
        %v962 = vrot.slane %v961, 1
        %v963 = vsel %vm414, %v961, %v962
        %v965 = vadd.f32 %v945, %v963
        %s966 = sld [smem:[#allocation5 + $0x58]]
        %v967 = vstv %s966
        %v968 = vmul.f32 %v967, %v334
        %970 = vrot.lane.b32.xlu0 %v968, 48
        %v971 = vpop.permute.xlu0 %970
        %v972 = vrot.slane %v971, 1
        %v973 = vsel %vm414, %v971, %v972
        %v975 = vadd.f32 %v955, %v973
        %s976 = sld [smem:[#allocation5 + $0x2e]]
        %v977 = vstv %s976
        %v978 = vmul.f32 %v977, %v322
        %980 = vrot.lane.b32.xlu0 %v978, 32
        %v981 = vpop.permute.xlu0 %980
        %v982 = vrot.slane %v981, 1
        %v983 = vsel %vm435, %v981, %v982
        %v985 = vadd.f32 %v965, %v983
        %s986 = sld [smem:[#allocation5 + $0x5f]]
        %v987 = vstv %s986
        %v988 = vmul.f32 %v987, %v334
        %990 = vrot.lane.b32.xlu0 %v988, 32
        %v991 = vpop.permute.xlu0 %990
        %v992 = vrot.slane %v991, 1
        %v993 = vsel %vm435, %v991, %v992
        %v995 = vadd.f32 %v975, %v993
        %v996 = vadd.f32 %v985, %v995
        %vm997 = vcmp.le.s32.totalorder %v307, 14
        %999 = vrot.lane.b32.xlu0 %v996, 124
        %v1000 = vpop.permute.xlu0 %999
        %v1001 = vrot.slane %v1000, 1
        %vm1002 = vcmask 1014784
        %v1003 = vsel %vm1002, %v1000, %v1001
        %v1005 = vsel %vm997, %v1003, 0.0
        %v1006 = vadd.f32 %v867, %v1005
        %s1007 = sld [smem:[#allocation5 + $0x5]]
        %v1008 = vstv %s1007
        %v1009 = vmul.f32 %v1008, %v322
        %v1010 = vadd.f32 %v1009, 0.0
        %s1011 = sld [smem:[#allocation5 + $0x36]]
        %v1012 = vstv %s1011
        %v1013 = vmul.f32 %v1012, %v334
        %v1014 = vadd.f32 %v1013, 0.0
        %s1015 = sld [smem:[#allocation5 + $0xc]]
        %v1016 = vstv %s1015
        %v1017 = vmul.f32 %v1016, %v322
        %1019 = vrot.lane.b32.xlu0 %v1017, 112
        %v1020 = vpop.permute.xlu0 %1019
        %v1021 = vrot.slane %v1020, 1
        %v1022 = vsel %vm329, %v1020, %v1021
        %v1024 = vadd.f32 %v1010, %v1022
        %s1025 = sld [smem:[#allocation5 + $0x3d]]
        %v1026 = vstv %s1025
        %v1027 = vmul.f32 %v1026, %v334
        %1029 = vrot.lane.b32.xlu0 %v1027, 112
        %v1030 = vpop.permute.xlu0 %1029
        %v1031 = vrot.slane %v1030, 1
        %v1032 = vsel %vm329, %v1030, %v1031
        %v1034 = vadd.f32 %v1014, %v1032
        %s1035 = sld [smem:[#allocation5 + $0x13]]
        %v1036 = vstv %s1035
        %v1037 = vmul.f32 %v1036, %v322
        %1039 = vrot.lane.b32.xlu0 %v1037, 96
        %v1040 = vpop.permute.xlu0 %1039
        %v1041 = vrot.slane %v1040, 1
        %v1042 = vsel %vm351, %v1040, %v1041
        %v1044 = vadd.f32 %v1024, %v1042
        %s1045 = sld [smem:[#allocation5 + $0x44]]
        %v1046 = vstv %s1045
        %v1047 = vmul.f32 %v1046, %v334
        %1049 = vrot.lane.b32.xlu0 %v1047, 96
        %v1050 = vpop.permute.xlu0 %1049
        %v1051 = vrot.slane %v1050, 1
        %v1052 = vsel %vm351, %v1050, %v1051
        %v1054 = vadd.f32 %v1034, %v1052
        %s1055 = sld [smem:[#allocation5 + $0x1a]]
        %v1056 = vstv %s1055
        %v1057 = vmul.f32 %v1056, %v322
        %1059 = vrot.lane.b32.xlu0 %v1057, 80
        %v1060 = vpop.permute.xlu0 %1059
        %v1061 = vrot.slane %v1060, 1
        %v1062 = vsel %vm372, %v1060, %v1061
        %v1064 = vadd.f32 %v1044, %v1062
        %s1065 = sld [smem:[#allocation5 + $0x4b]]
        %v1066 = vstv %s1065
        %v1067 = vmul.f32 %v1066, %v334
        %1069 = vrot.lane.b32.xlu0 %v1067, 80
        %v1070 = vpop.permute.xlu0 %1069
        %v1071 = vrot.slane %v1070, 1
        %v1072 = vsel %vm372, %v1070, %v1071
        %v1074 = vadd.f32 %v1054, %v1072
        %s1075 = sld [smem:[#allocation5 + $0x21]]
        %v1076 = vstv %s1075
        %v1077 = vmul.f32 %v1076, %v322
        %1079 = vrot.lane.b32.xlu0 %v1077, 64
        %v1080 = vpop.permute.xlu0 %1079
        %v1081 = vrot.slane %v1080, 1
        %v1082 = vsel %vm393, %v1080, %v1081
        %v1084 = vadd.f32 %v1064, %v1082
        %s1085 = sld [smem:[#allocation5 + $0x52]]
        %v1086 = vstv %s1085
        %v1087 = vmul.f32 %v1086, %v334
        %1089 = vrot.lane.b32.xlu0 %v1087, 64
        %v1090 = vpop.permute.xlu0 %1089
        %v1091 = vrot.slane %v1090, 1
        %v1092 = vsel %vm393, %v1090, %v1091
        %v1094 = vadd.f32 %v1074, %v1092
        %s1095 = sld [smem:[#allocation5 + $0x28]]
        %v1096 = vstv %s1095
        %v1097 = vmul.f32 %v1096, %v322
        %1099 = vrot.lane.b32.xlu0 %v1097, 48
        %v1100 = vpop.permute.xlu0 %1099
        %v1101 = vrot.slane %v1100, 1
        %v1102 = vsel %vm414, %v1100, %v1101
        %v1104 = vadd.f32 %v1084, %v1102
        %s1105 = sld [smem:[#allocation5 + $0x59]]
        %v1106 = vstv %s1105
        %v1107 = vmul.f32 %v1106, %v334
        %1109 = vrot.lane.b32.xlu0 %v1107, 48
        %v1110 = vpop.permute.xlu0 %1109
        %v1111 = vrot.slane %v1110, 1
        %v1112 = vsel %vm414, %v1110, %v1111
        %v1114 = vadd.f32 %v1094, %v1112
        %s1115 = sld [smem:[#allocation5 + $0x2f]]
        %v1116 = vstv %s1115
        %v1117 = vmul.f32 %v1116, %v322
        %1119 = vrot.lane.b32.xlu0 %v1117, 32
        %v1120 = vpop.permute.xlu0 %1119
        %v1121 = vrot.slane %v1120, 1
        %v1122 = vsel %vm435, %v1120, %v1121
        %v1124 = vadd.f32 %v1104, %v1122
        %s1125 = sld [smem:[#allocation5 + $0x60]]
        %v1126 = vstv %s1125
        %v1127 = vmul.f32 %v1126, %v334
        %1129 = vrot.lane.b32.xlu0 %v1127, 32
        %v1130 = vpop.permute.xlu0 %1129
        %v1131 = vrot.slane %v1130, 1
        %v1132 = vsel %vm435, %v1130, %v1131
        %v1134 = vadd.f32 %v1114, %v1132
        %v1135 = vadd.f32 %v1124, %v1134
        %vm1136 = vcmp.le.s32.totalorder %v307, 13
        %1138 = vrot.lane.b32.xlu0 %v1135, 123
        %v1139 = vpop.permute.xlu0 %1138
        %v1140 = vrot.slane %v1139, 1
        %vm1141 = vcmask 1006592
        %v1142 = vsel %vm1141, %v1139, %v1140
        %v1144 = vsel %vm1136, %v1142, 0.0
        %v1145 = vadd.f32 %v1006, %v1144
        %s1146 = sld [smem:[#allocation5 + $0x6]]
        %v1147 = vstv %s1146
        %v1148 = vmul.f32 %v1147, %v322
        %v1149 = vadd.f32 %v1148, 0.0
        %s1150 = sld [smem:[#allocation5 + $0x37]]
        %v1151 = vstv %s1150
        %v1152 = vmul.f32 %v1151, %v334
        %v1153 = vadd.f32 %v1152, 0.0
        %s1154 = sld [smem:[#allocation5 + $0xd]]
        %v1155 = vstv %s1154
        %v1156 = vmul.f32 %v1155, %v322
        %1158 = vrot.lane.b32.xlu0 %v1156, 112
        %v1159 = vpop.permute.xlu0 %1158
        %v1160 = vrot.slane %v1159, 1
        %v1161 = vsel %vm329, %v1159, %v1160
        %v1163 = vadd.f32 %v1149, %v1161
        %s1164 = sld [smem:[#allocation5 + $0x3e]]
        %v1165 = vstv %s1164
        %v1166 = vmul.f32 %v1165, %v334
        %1168 = vrot.lane.b32.xlu0 %v1166, 112
        %v1169 = vpop.permute.xlu0 %1168
        %v1170 = vrot.slane %v1169, 1
        %v1171 = vsel %vm329, %v1169, %v1170
        %v1173 = vadd.f32 %v1153, %v1171
        %s1174 = sld [smem:[#allocation5 + $0x14]]
        %v1175 = vstv %s1174
        %v1176 = vmul.f32 %v1175, %v322
        %1178 = vrot.lane.b32.xlu0 %v1176, 96
        %v1179 = vpop.permute.xlu0 %1178
        %v1180 = vrot.slane %v1179, 1
        %v1181 = vsel %vm351, %v1179, %v1180
        %v1183 = vadd.f32 %v1163, %v1181
        %s1184 = sld [smem:[#allocation5 + $0x45]]
        %v1185 = vstv %s1184
        %v1186 = vmul.f32 %v1185, %v334
        %1188 = vrot.lane.b32.xlu0 %v1186, 96
        %v1189 = vpop.permute.xlu0 %1188
        %v1190 = vrot.slane %v1189, 1
        %v1191 = vsel %vm351, %v1189, %v1190
        %v1193 = vadd.f32 %v1173, %v1191
        %s1194 = sld [smem:[#allocation5 + $0x1b]]
        %v1195 = vstv %s1194
        %v1196 = vmul.f32 %v1195, %v322
        %1198 = vrot.lane.b32.xlu0 %v1196, 80
        %v1199 = vpop.permute.xlu0 %1198
        %v1200 = vrot.slane %v1199, 1
        %v1201 = vsel %vm372, %v1199, %v1200
        %v1203 = vadd.f32 %v1183, %v1201
        %s1204 = sld [smem:[#allocation5 + $0x4c]]
        %v1205 = vstv %s1204
        %v1206 = vmul.f32 %v1205, %v334
        %1208 = vrot.lane.b32.xlu0 %v1206, 80
        %v1209 = vpop.permute.xlu0 %1208
        %v1210 = vrot.slane %v1209, 1
        %v1211 = vsel %vm372, %v1209, %v1210
        %v1213 = vadd.f32 %v1193, %v1211
        %s1214 = sld [smem:[#allocation5 + $0x22]]
        %v1215 = vstv %s1214
        %v1216 = vmul.f32 %v1215, %v322
        %1218 = vrot.lane.b32.xlu0 %v1216, 64
        %v1219 = vpop.permute.xlu0 %1218
        %v1220 = vrot.slane %v1219, 1
        %v1221 = vsel %vm393, %v1219, %v1220
        %v1223 = vadd.f32 %v1203, %v1221
        %s1224 = sld [smem:[#allocation5 + $0x53]]
        %v1225 = vstv %s1224
        %v1226 = vmul.f32 %v1225, %v334
        %1228 = vrot.lane.b32.xlu0 %v1226, 64
        %v1229 = vpop.permute.xlu0 %1228
        %v1230 = vrot.slane %v1229, 1
        %v1231 = vsel %vm393, %v1229, %v1230
        %v1233 = vadd.f32 %v1213, %v1231
        %s1234 = sld [smem:[#allocation5 + $0x29]]
        %v1235 = vstv %s1234
        %v1236 = vmul.f32 %v1235, %v322
        %1238 = vrot.lane.b32.xlu0 %v1236, 48
        %v1239 = vpop.permute.xlu0 %1238
        %v1240 = vrot.slane %v1239, 1
        %v1241 = vsel %vm414, %v1239, %v1240
        %v1243 = vadd.f32 %v1223, %v1241
        %s1244 = sld [smem:[#allocation5 + $0x5a]]
        %v1245 = vstv %s1244
        %v1246 = vmul.f32 %v1245, %v334
        %1248 = vrot.lane.b32.xlu0 %v1246, 48
        %v1249 = vpop.permute.xlu0 %1248
        %v1250 = vrot.slane %v1249, 1
        %v1251 = vsel %vm414, %v1249, %v1250
        %v1253 = vadd.f32 %v1233, %v1251
        %s1254 = sld [smem:[#allocation5 + $0x30]]
        %v1255 = vstv %s1254
        %v1256 = vmul.f32 %v1255, %v322
        %1258 = vrot.lane.b32.xlu0 %v1256, 32
        %v1259 = vpop.permute.xlu0 %1258
        %v1260 = vrot.slane %v1259, 1
        %v1261 = vsel %vm435, %v1259, %v1260
        %v1263 = vadd.f32 %v1243, %v1261
        %s1264 = sld [smem:[#allocation5 + $0x61]]
        %v1265 = vstv %s1264
        %v1266 = vmul.f32 %v1265, %v334
        %1268 = vrot.lane.b32.xlu0 %v1266, 32
        %v1269 = vpop.permute.xlu0 %1268
        %v1270 = vrot.slane %v1269, 1
        %v1271 = vsel %vm435, %v1269, %v1270
        %v1273 = vadd.f32 %v1253, %v1271
        %v1274 = vadd.f32 %v1263, %v1273
        %vm1275 = vcmp.le.s32.totalorder %v307, 12
        %1277 = vrot.lane.b32.xlu0 %v1274, 122
        %v1278 = vpop.permute.xlu0 %1277
        %v1279 = vrot.slane %v1278, 1
        %vm1280 = vcmask 998400
        %v1281 = vsel %vm1280, %v1278, %v1279
        %v1283 = vsel %vm1275, %v1281, 0.0
        %v1284 = vadd.f32 %v1145, %v1283
        %v1285 = vsub.f32 0.0, %v1284
        %v1286 = vmul.f32 %v1285, 1.442695
        %v1287 = vpow.pop %v1286
        %v1288 = vadd.f32 %v1287, 1.0
        %v1289 = vrcp.pop %v1288
        %v1290 = vld [vmem:[%s207] sm:$0xff]
        %v1291 = vld [vmem:[%s207 + $0x8] sm:$0xff]
        %v1292 = vld [vmem:[%s207 + $0x10] sm:$0xff]
        %v1293 = vld [vmem:[%s207 + $0x18] sm:$0xff]
        %v1295 = vlaneseq
        %v1296 = vshrl.u32 %v1295, 7
        %v1297 = vsub.s32 0, %v1296
        %v1298 = vrot.slane %v1289, %v1297
        %v1299 = vlaneseq
        %v1300 = vshrl.u32 %v1299, 7
        %v1301 = vsub.s32 1, %v1300
        %v1302 = vrot.slane %v1289, %v1301
        %v1305 = vmul.f32 %v1290, %v1298
        %v1306 = vmul.f32 %v1291, %v1302
        %v1307 = vmul.f32 %v1292, %v1298
        %v1308 = vmul.f32 %v1293, %v1302
        %1309 = vst [vmem:[%s212] sm:$0xff] %v1305
        %1310 = vst [vmem:[%s212 + $0x8] sm:$0xff] %v1306
        %1311 = vst [vmem:[%s212 + $0x10] sm:$0xff] %v1307
        %1312 = vst [vmem:[%s212 + $0x18] sm:$0xff] %v1308
        %p1313 = scmp.lt.s32.totalorder %s17, 1
        %s1314 = scalar_select %p1313, %s17, 1
        %s1315 = smul.addr %s1314, 4
        %s1316 = smul.addr %s1315, 8
        %s1317 = scalar_lea.vmem %s4, %s1316
        // Predicated region
        $region41: #{spatial_attention.1} parent=35 // pred_check
          %p1318 = pneg %p124
        $region42: #{spatial_attention.1} parent=35 // pred_check_branch
          %1320 = sbr.rel (%p1318) target = $region44
        $region43: #{spatial_attention.1} parent=35 // pred_region
          _
        $region44: #{spatial_attention.1} parent=35 // pred_fallthru
          _
      $region36: #{spatial_attention.1} parent=5 // pred_fallthru
        _
      %p1321 = scmp.le.s32.totalorder 2, %s12
      // Predicated region
      $region45: #{spatial_attention.1} parent=5 // pred_check
        %p1322 = pneg %p1321
      $region46: #{spatial_attention.1} parent=5 // pred_check_branch
        %1324 = sbr.rel (%p1322) target = $region48
      $region47: #{spatial_attention.1} parent=5 // pred_region
        %s1325 = ssub.s32 %s12, 2
        // Predicated region
        $region49: #{spatial_attention.1} parent=47 // pred_check
          %p1326 = pneg %p130
        $region50: #{spatial_attention.1} parent=47 // pred_check_branch
          %1328 = sbr.rel (%p1326) target = $region52
        $region51: #{spatial_attention.1} parent=47 // pred_region
          %p1329 = scmp.lt.s32.totalorder %s18, 1
          %s1330 = scalar_select %p1329, %s18, 1
          %s1331 = smul.addr %s1330, 4
          %s1332 = smul.addr %s1331, 8
          %s1333 = scalar_lea.vmem %s4, %s1332
        $region52: #{spatial_attention.1} parent=47 // pred_fallthru
          _
      $region48: #{spatial_attention.1} parent=5 // pred_fallthru
        _
    $region6: #{spatial_attention.1} parent=1 // loop_footer
      %s16 = sadd.s32 1, %s12
    $region7: #{spatial_attention.1} parent=1 // loop_footer_branch
      %11 = sbr.rel target = $region3
    $region8: #{spatial_attention.1} parent=1 // loop_exit
      _
    %1334 = vsyncpa [#allocation6], 1
    %s1335 = scalar_lea.sflag [#allocation6], 1
    %1336 = vsyncpa %s1335, 1

</llo_original>
